<compile_context>
chip_gen: v6e
topology: v6e:2x2x1
jax: 0.10.0
libtpu: 0.0.40
codegen_flags: <defaults>
</compile_context>

<pallas_src>
import math
import jax
import jax.numpy as jnp
from jax.experimental import pallas as pl
from jax.experimental.pallas import tpu as pltpu


def _round_up(x, m):
    return (x + m - 1) // m * m


def gru_encoder_kernel(gi_ref, whh_ref, bhhn_ref, out_ref, hid_ref, h_scratch):
    # grid = (batch_tiles [parallel], time_chunks [arbitrary])
    tc = pl.program_id(1)
    n_tc = pl.num_programs(1)
    Bt, Hp = h_scratch.shape         # padded batch tile, padded hidden width
    Tc = gi_ref.shape[0]             # timesteps in this chunk (static)

    @pl.when(tc == 0)
    def _():
        h_scratch[...] = jnp.zeros_like(h_scratch)

    whh = whh_ref[...]               # (Hp, 3*Hp), possibly bf16
    # n-gate recurrent bias, broadcast ONCE per chunk (hoisted out of the loop).
    bhh_n = jnp.broadcast_to(bhhn_ref[...], (Bt, Hp))   # (Bt, Hp) f32

    def step(i, h):
        gi = gi_ref[i]               # (Bt, 3*Hp) precomputed x@W_ih^T + folded biases
        gh = jnp.dot(h.astype(whh.dtype), whh,
                     preferred_element_type=jnp.float32)        # (Bt, 3*Hp)
        r = jax.nn.sigmoid(gi[:, 0:Hp] + gh[:, 0:Hp])
        z = jax.nn.sigmoid(gi[:, Hp:2 * Hp] + gh[:, Hp:2 * Hp])
        n = jnp.tanh(gi[:, 2 * Hp:3 * Hp] + r * (gh[:, 2 * Hp:3 * Hp] + bhh_n))
        h_new = (1.0 - z) * n + z * h
        out_ref[i] = h_new.astype(out_ref.dtype)
        return h_new

    # Hidden carried in vregs inside the chunk; VMEM scratch only at chunk edges.
    h_last = jax.lax.fori_loop(0, Tc, step, h_scratch[...], unroll=True)

    @pl.when(tc < n_tc - 1)
    def _():
        h_scratch[...] = h_last      # only needed if another time chunk follows

    @pl.when(tc == n_tc - 1)
    def _():
        hid_ref[...] = h_last.astype(hid_ref.dtype)


def encoder_forward(src, emb_table, w_ih, w_hh, b_ih, b_hh,
                    *, time_block=None, batch_block=None,
                    mxu_dtype=jnp.float32):
    """src: (S, B) int32 tokens (seq-first, like torch.nn.GRU default).

    Returns (outputs (S, B, H), hidden (1, B, H)) matching torch.nn.GRU with h0=0.
    Set mxu_dtype=jnp.bfloat16 on v6e/v7x for higher MXU throughput.
    """
    S, B = src.shape
    H = w_hh.shape[1]                         # w_hh: (3H, H), gate order r,z,n
    Hp = _round_up(H, 128)                    # lane-dense per-gate width
    Bp = _round_up(B, 8)                      # sublane-dense batch
    Tc = S if time_block is None else time_block
    assert S % Tc == 0, "time_block must divide seq_len"
    Bt = Bp if batch_block is None else batch_block
    assert Bp % Bt == 0 and Bt % 8 == 0

    hi = jax.lax.Precision.HIGHEST
    f32 = jnp.float32

    # ---------------- glue (plain XLA, outside the serial loop) ----------------
    embedded = jnp.take(emb_table, src, axis=0).astype(f32)          # (S, B, E)

    # Hoisted input projection for ALL timesteps as one big matmul.
    # Fold biases: r/z gates get b_ih + b_hh here; n gate gets only b_ih here
    # (its b_hh part must remain inside the r*(...) term in the kernel).
    b_fold = b_ih.astype(f32) + jnp.concatenate(
        [b_hh[:2 * H].astype(f32), jnp.zeros((H,), f32)])
    gi = jnp.einsum("sbe,ge->sbg", embedded, w_ih.astype(f32),
                    precision=hi) + b_fold                            # (S, B, 3H)

    # ------------- pad to lane/sublane-dense, per-gate padded layout -----------
    gi_p = jnp.pad(gi.reshape(S, B, 3, H),
                   ((0, 0), (0, Bp - B), (0, 0), (0, Hp - H))
                   ).reshape(S, Bp, 3 * Hp)

    w3t = jnp.transpose(w_hh.astype(f32).reshape(3, H, H), (2, 0, 1))  # (in, gate, out)
    whh_t = jnp.pad(w3t, ((0, Hp - H), (0, 0), (0, Hp - H))).reshape(Hp, 3 * Hp)
    whh_t = whh_t.astype(mxu_dtype)

    # Only the n-gate recurrent bias goes into the kernel, padded to width Hp.
    bhh_n = jnp.zeros((1, Hp), f32).at[0, :H].set(b_hh[2 * H:].astype(f32))

    # --------------------------------- kernel ----------------------------------
    out_p, hid_p = pl.pallas_call(
        gru_encoder_kernel,
        out_shape=(jax.ShapeDtypeStruct((S, Bp, Hp), f32),
                   jax.ShapeDtypeStruct((Bp, Hp), f32)),
        grid_spec=pltpu.PrefetchScalarGridSpec(
            num_scalar_prefetch=0,
            grid=(Bp // Bt, S // Tc),
            in_specs=[
                pl.BlockSpec((Tc, Bt, 3 * Hp), lambda b, t: (t, b, 0)),  # gi chunk
                pl.BlockSpec((Hp, 3 * Hp), lambda b, t: (0, 0)),         # W_hh^T
                pl.BlockSpec((1, Hp), lambda b, t: (0, 0)),              # b_hh (n gate)
            ],
            out_specs=[
                pl.BlockSpec((Tc, Bt, Hp), lambda b, t: (t, b, 0)),      # outputs slab
                pl.BlockSpec((Bt, Hp), lambda b, t: (b, 0)),             # final hidden
            ],
            scratch_shapes=[pltpu.VMEM((Bt, Hp), f32)],
        ),
        compiler_params=pltpu.CompilerParams(
            # batch tiles are independent (megacore); time is a true recurrence.
            dimension_semantics=("parallel", "arbitrary")),
    )(gi_p, whh_t, bhh_n)

    outputs = out_p[:, :B, :H]
    hidden = hid_p[:B, :H][None]
    return outputs, hidden


def gru_reference(embedded, w_ih, w_hh, b_ih, b_hh):
    """Pure-JAX reference of torch.nn.GRU (1 layer, h0 = 0)."""
    S, B, E = embedded.shape
    H = w_hh.shape[1]
    hi = jax.lax.Precision.HIGHEST

    def step(h, x):
        gi = jnp.dot(x, w_ih.T, precision=hi) + b_ih
        gh = jnp.dot(h, w_hh.T, precision=hi) + b_hh
        r = jax.nn.sigmoid(gi[:, 0:H] + gh[:, 0:H])
        z = jax.nn.sigmoid(gi[:, H:2 * H] + gh[:, H:2 * H])
        n = jnp.tanh(gi[:, 2 * H:3 * H] + r * gh[:, 2 * H:3 * H])
        h_new = (1.0 - z) * n + z * h
        return h_new, h_new

    h0 = jnp.zeros((B, H), jnp.float32)
    h_last, outs = jax.lax.scan(step, h0, embedded)
    return outs, h_last[None]


if __name__ == "__main__":
    # Module hyperparameters (small synthetic sizes).
    input_dim = 50      # vocab size
    emb_dim = 32
    hidden_dim = 32
    seq_len = 8
    batch = 2

    key = jax.random.PRNGKey(0)
    k_emb, k_wih, k_whh, k_bih, k_bhh, k_src = jax.random.split(key, 6)

    # Deterministic parameter init (PyTorch-style shapes; GRU gate order r,z,n).
    emb_table = jax.random.normal(k_emb, (input_dim, emb_dim), jnp.float32)
    bound = 1.0 / math.sqrt(hidden_dim)
    w_ih = jax.random.uniform(k_wih, (3 * hidden_dim, emb_dim), jnp.float32, -bound, bound)
    w_hh = jax.random.uniform(k_whh, (3 * hidden_dim, hidden_dim), jnp.float32, -bound, bound)
    b_ih = jax.random.uniform(k_bih, (3 * hidden_dim,), jnp.float32, -bound, bound)
    b_hh = jax.random.uniform(k_bhh, (3 * hidden_dim,), jnp.float32, -bound, bound)

    # Token indices, seq-first like PyTorch nn.GRU default.
    src = jax.random.randint(k_src, (seq_len, batch), 0, input_dim, jnp.int32)

    outputs, hidden = encoder_forward(src, emb_table, w_ih, w_hh, b_ih, b_hh)
    jax.block_until_ready((outputs, hidden))

    # Correctness check against pure-JAX reference.
    embedded = jnp.take(emb_table, src, axis=0)
    ref_out, ref_hid = gru_reference(embedded, w_ih, w_hh, b_ih, b_hh)
    assert outputs.shape == (seq_len, batch, hidden_dim)
    assert hidden.shape == (1, batch, hidden_dim)
    assert jnp.allclose(outputs, ref_out, atol=1e-5), "outputs mismatch"
    assert jnp.allclose(hidden, ref_hid, atol=1e-5), "hidden mismatch"

    print("KERNEL_OK")
</pallas_src>

<mosaic_0001>
module attributes {stable_mosaic.version = 11 : i64} {
  func.func @gru_encoder_kernel(%arg0: i32, %arg1: i32, %arg2: memref<8x8x384xf32, #tpu.memory_space<vmem>>, %arg3: memref<128x384xf32, #tpu.memory_space<vmem>>, %arg4: memref<1x128xf32, #tpu.memory_space<vmem>>, %arg5: memref<8x8x128xf32, #tpu.memory_space<vmem>>, %arg6: memref<8x128xf32, #tpu.memory_space<vmem>>, %arg7: memref<8x128xf32, #tpu.memory_space<vmem>>) attributes {dimension_semantics = [#tpu.dimension_semantics<parallel>, #tpu.dimension_semantics<arbitrary>], iteration_bounds = array<i64: 1, 1>, scalar_prefetch = 0 : i64, scratch_operands = 1 : i64, tpu.core_type = #tpu.core_type<tc>, window_params = [{transform_indices = @transform_0, window_bounds = array<i64: 8, 8, 384>}, {pipeline_mode = #tpu.pipeline_mode<synchronous>, transform_indices = @transform_1, window_bounds = array<i64: 128, 384>}, {pipeline_mode = #tpu.pipeline_mode<synchronous>, transform_indices = @transform_2, window_bounds = array<i64: 1, 128>}, {transform_indices = @transform_3, window_bounds = array<i64: 8, 8, 128>}, {transform_indices = @transform_4, window_bounds = array<i64: 8, 128>}]} {
    %c0_i32 = arith.constant 0 : i32
    %0 = arith.cmpi eq, %arg1, %c0_i32 : i32
    %1 = arith.extui %0 : i1 to i32
    %c0_i32_0 = arith.constant 0 : i32
    %2 = arith.cmpi ne, %1, %c0_i32_0 : i32
    scf.if %2 {
      %cst_74 = arith.constant 0.000000e+00 : f32
      %294 = vector.broadcast %cst_74 : f32 to vector<8x128xf32>
      %c0_75 = arith.constant 0 : index
      %c0_76 = arith.constant 0 : index
      %295 = vector.load %arg7[%c0_75, %c0_76] : memref<8x128xf32, #tpu.memory_space<vmem>>, vector<8x128xf32>
      tpu.vector_store %arg7[%c0_75, %c0_76], %294 {strides = array<i32>} : memref<8x128xf32, #tpu.memory_space<vmem>>, vector<8x128xf32>,
    } else {
    }
    %c0 = arith.constant 0 : index
    %c0_1 = arith.constant 0 : index
    %3 = vector.load %arg3[%c0, %c0_1] : memref<128x384xf32, #tpu.memory_space<vmem>>, vector<128x384xf32>
    %c0_2 = arith.constant 0 : index
    %c0_3 = arith.constant 0 : index
    %4 = vector.load %arg4[%c0_2, %c0_3] : memref<1x128xf32, #tpu.memory_space<vmem>>, vector<1x128xf32>
    %5 = vector.shape_cast %4 : vector<1x128xf32> to vector<1x128xf32>
    %6 = vector.broadcast %5 : vector<1x128xf32> to vector<8x128xf32>
    %c0_4 = arith.constant 0 : index
    %c0_5 = arith.constant 0 : index
    %7 = vector.load %arg7[%c0_4, %c0_5] : memref<8x128xf32, #tpu.memory_space<vmem>>, vector<8x128xf32>
    %c0_i32_6 = arith.constant 0 : i32
    %8 = arith.index_cast %c0_i32_6 : i32 to index
    %c0_7 = arith.constant 0 : index
    %c0_8 = arith.constant 0 : index
    %9 = vector.load %arg2[%8, %c0_7, %c0_8] : memref<8x8x384xf32, #tpu.memory_space<vmem>>, vector<1x8x384xf32>
    %10 = vector.shape_cast %9 : vector<1x8x384xf32> to vector<8x384xf32>
    %cst = arith.constant dense<0.000000e+00> : vector<8x384xf32>
    %11 = tpu.matmul %7, %3, %cst {dimension_numbers = #tpu.dot_dimension_numbers<[1], [0], [0], [1], [0, 0, 1, 1], [], []>} : vector<8x128xf32>, vector<128x384xf32>, vector<8x384xf32> -> vector<8x384xf32>
    %12 = vector.extract_strided_slice %10 {offsets = [0, 0], sizes = [8, 128], strides = [1, 1]} : vector<8x384xf32> to vector<8x128xf32>
    %13 = vector.extract_strided_slice %11 {offsets = [0, 0], sizes = [8, 128], strides = [1, 1]} : vector<8x384xf32> to vector<8x128xf32>
    %14 = arith.addf %12, %13 : vector<8x128xf32>
    %15 = arith.negf %14 : vector<8x128xf32>
    %16 = math.exp %15 : vector<8x128xf32>
    %cst_9 = arith.constant 1.000000e+00 : f32
    %17 = vector.broadcast %cst_9 : f32 to vector<8x128xf32>
    %18 = arith.addf %17, %16 : vector<8x128xf32>
    %19 = arith.divf %17, %18 : vector<8x128xf32>
    %20 = vector.extract_strided_slice %10 {offsets = [0, 128], sizes = [8, 128], strides = [1, 1]} : vector<8x384xf32> to vector<8x128xf32>
    %21 = vector.extract_strided_slice %11 {offsets = [0, 128], sizes = [8, 128], strides = [1, 1]} : vector<8x384xf32> to vector<8x128xf32>
    %22 = arith.addf %20, %21 : vector<8x128xf32>
    %23 = arith.negf %22 : vector<8x128xf32>
    %24 = math.exp %23 : vector<8x128xf32>
    %cst_10 = arith.constant 1.000000e+00 : f32
    %25 = vector.broadcast %cst_10 : f32 to vector<8x128xf32>
    %26 = arith.addf %25, %24 : vector<8x128xf32>
    %27 = arith.divf %25, %26 : vector<8x128xf32>
    %28 = vector.extract_strided_slice %10 {offsets = [0, 256], sizes = [8, 128], strides = [1, 1]} : vector<8x384xf32> to vector<8x128xf32>
    %29 = vector.extract_strided_slice %11 {offsets = [0, 256], sizes = [8, 128], strides = [1, 1]} : vector<8x384xf32> to vector<8x128xf32>
    %30 = arith.addf %29, %6 : vector<8x128xf32>
    %31 = arith.mulf %19, %30 : vector<8x128xf32>
    %32 = arith.addf %28, %31 : vector<8x128xf32>
    %33 = math.tanh %32 : vector<8x128xf32>
    %cst_11 = arith.constant 1.000000e+00 : f32
    %34 = vector.broadcast %cst_11 : f32 to vector<8x128xf32>
    %35 = arith.subf %34, %27 : vector<8x128xf32>
    %36 = arith.mulf %35, %33 : vector<8x128xf32>
    %37 = arith.mulf %27, %7 : vector<8x128xf32>
    %38 = arith.addf %36, %37 : vector<8x128xf32>
    %39 = arith.index_cast %c0_i32_6 : i32 to index
    %c0_12 = arith.constant 0 : index
    %c0_13 = arith.constant 0 : index
    %40 = vector.load %arg5[%39, %c0_12, %c0_13] : memref<8x8x128xf32, #tpu.memory_space<vmem>>, vector<1x8x128xf32>
    %41 = vector.shape_cast %40 : vector<1x8x128xf32> to vector<8x128xf32>
    %42 = vector.shape_cast %38 : vector<8x128xf32> to vector<1x8x128xf32>
    tpu.vector_store %arg5[%39, %c0_12, %c0_13], %42 {strides = array<i32>} : memref<8x8x128xf32, #tpu.memory_space<vmem>>, vector<1x8x128xf32>,
    %c1_i32 = arith.constant 1 : i32
    %43 = arith.index_cast %c1_i32 : i32 to index
    %c0_14 = arith.constant 0 : index
    %c0_15 = arith.constant 0 : index
    %44 = vector.load %arg2[%43, %c0_14, %c0_15] : memref<8x8x384xf32, #tpu.memory_space<vmem>>, vector<1x8x384xf32>
    %45 = vector.shape_cast %44 : vector<1x8x384xf32> to vector<8x384xf32>
    %cst_16 = arith.constant dense<0.000000e+00> : vector<8x384xf32>
    %46 = tpu.matmul %38, %3, %cst_16 {dimension_numbers = #tpu.dot_dimension_numbers<[1], [0], [0], [1], [0, 0, 1, 1], [], []>} : vector<8x128xf32>, vector<128x384xf32>, vector<8x384xf32> -> vector<8x384xf32>
    %47 = vector.extract_strided_slice %45 {offsets = [0, 0], sizes = [8, 128], strides = [1, 1]} : vector<8x384xf32> to vector<8x128xf32>
    %48 = vector.extract_strided_slice %46 {offsets = [0, 0], sizes = [8, 128], strides = [1, 1]} : vector<8x384xf32> to vector<8x128xf32>
    %49 = arith.addf %47, %48 : vector<8x128xf32>
    %50 = arith.negf %49 : vector<8x128xf32>
    %51 = math.exp %50 : vector<8x128xf32>
    %cst_17 = arith.constant 1.000000e+00 : f32
    %52 = vector.broadcast %cst_17 : f32 to vector<8x128xf32>
    %53 = arith.addf %52, %51 : vector<8x128xf32>
    %54 = arith.divf %52, %53 : vector<8x128xf32>
    %55 = vector.extract_strided_slice %45 {offsets = [0, 128], sizes = [8, 128], strides = [1, 1]} : vector<8x384xf32> to vector<8x128xf32>
    %56 = vector.extract_strided_slice %46 {offsets = [0, 128], sizes = [8, 128], strides = [1, 1]} : vector<8x384xf32> to vector<8x128xf32>
    %57 = arith.addf %55, %56 : vector<8x128xf32>
    %58 = arith.negf %57 : vector<8x128xf32>
    %59 = math.exp %58 : vector<8x128xf32>
    %cst_18 = arith.constant 1.000000e+00 : f32
    %60 = vector.broadcast %cst_18 : f32 to vector<8x128xf32>
    %61 = arith.addf %60, %59 : vector<8x128xf32>
    %62 = arith.divf %60, %61 : vector<8x128xf32>
    %63 = vector.extract_strided_slice %45 {offsets = [0, 256], sizes = [8, 128], strides = [1, 1]} : vector<8x384xf32> to vector<8x128xf32>
    %64 = vector.extract_strided_slice %46 {offsets = [0, 256], sizes = [8, 128], strides = [1, 1]} : vector<8x384xf32> to vector<8x128xf32>
    %65 = arith.addf %64, %6 : vector<8x128xf32>
    %66 = arith.mulf %54, %65 : vector<8x128xf32>
    %67 = arith.addf %63, %66 : vector<8x128xf32>
    %68 = math.tanh %67 : vector<8x128xf32>
    %cst_19 = arith.constant 1.000000e+00 : f32
    %69 = vector.broadcast %cst_19 : f32 to vector<8x128xf32>
    %70 = arith.subf %69, %62 : vector<8x128xf32>
    %71 = arith.mulf %70, %68 : vector<8x128xf32>
    %72 = arith.mulf %62, %38 : vector<8x128xf32>
    %73 = arith.addf %71, %72 : vector<8x128xf32>
    %74 = arith.index_cast %c1_i32 : i32 to index
    %c0_20 = arith.constant 0 : index
    %c0_21 = arith.constant 0 : index
    %75 = vector.load %arg5[%74, %c0_20, %c0_21] : memref<8x8x128xf32, #tpu.memory_space<vmem>>, vector<1x8x128xf32>
    %76 = vector.shape_cast %75 : vector<1x8x128xf32> to vector<8x128xf32>
    %77 = vector.shape_cast %73 : vector<8x128xf32> to vector<1x8x128xf32>
    tpu.vector_store %arg5[%74, %c0_20, %c0_21], %77 {strides = array<i32>} : memref<8x8x128xf32, #tpu.memory_space<vmem>>, vector<1x8x128xf32>,
    %c2_i32 = arith.constant 2 : i32
    %78 = arith.index_cast %c2_i32 : i32 to index
    %c0_22 = arith.constant 0 : index
    %c0_23 = arith.constant 0 : index
    %79 = vector.load %arg2[%78, %c0_22, %c0_23] : memref<8x8x384xf32, #tpu.memory_space<vmem>>, vector<1x8x384xf32>
    %80 = vector.shape_cast %79 : vector<1x8x384xf32> to vector<8x384xf32>
    %cst_24 = arith.constant dense<0.000000e+00> : vector<8x384xf32>
    %81 = tpu.matmul %73, %3, %cst_24 {dimension_numbers = #tpu.dot_dimension_numbers<[1], [0], [0], [1], [0, 0, 1, 1], [], []>} : vector<8x128xf32>, vector<128x384xf32>, vector<8x384xf32> -> vector<8x384xf32>
    %82 = vector.extract_strided_slice %80 {offsets = [0, 0], sizes = [8, 128], strides = [1, 1]} : vector<8x384xf32> to vector<8x128xf32>
    %83 = vector.extract_strided_slice %81 {offsets = [0, 0], sizes = [8, 128], strides = [1, 1]} : vector<8x384xf32> to vector<8x128xf32>
    %84 = arith.addf %82, %83 : vector<8x128xf32>
    %85 = arith.negf %84 : vector<8x128xf32>
    %86 = math.exp %85 : vector<8x128xf32>
    %cst_25 = arith.constant 1.000000e+00 : f32
    %87 = vector.broadcast %cst_25 : f32 to vector<8x128xf32>
    %88 = arith.addf %87, %86 : vector<8x128xf32>
    %89 = arith.divf %87, %88 : vector<8x128xf32>
    %90 = vector.extract_strided_slice %80 {offsets = [0, 128], sizes = [8, 128], strides = [1, 1]} : vector<8x384xf32> to vector<8x128xf32>
    %91 = vector.extract_strided_slice %81 {offsets = [0, 128], sizes = [8, 128], strides = [1, 1]} : vector<8x384xf32> to vector<8x128xf32>
    %92 = arith.addf %90, %91 : vector<8x128xf32>
    %93 = arith.negf %92 : vector<8x128xf32>
    %94 = math.exp %93 : vector<8x128xf32>
    %cst_26 = arith.constant 1.000000e+00 : f32
    %95 = vector.broadcast %cst_26 : f32 to vector<8x128xf32>
    %96 = arith.addf %95, %94 : vector<8x128xf32>
    %97 = arith.divf %95, %96 : vector<8x128xf32>
    %98 = vector.extract_strided_slice %80 {offsets = [0, 256], sizes = [8, 128], strides = [1, 1]} : vector<8x384xf32> to vector<8x128xf32>
    %99 = vector.extract_strided_slice %81 {offsets = [0, 256], sizes = [8, 128], strides = [1, 1]} : vector<8x384xf32> to vector<8x128xf32>
    %100 = arith.addf %99, %6 : vector<8x128xf32>
    %101 = arith.mulf %89, %100 : vector<8x128xf32>
    %102 = arith.addf %98, %101 : vector<8x128xf32>
    %103 = math.tanh %102 : vector<8x128xf32>
    %cst_27 = arith.constant 1.000000e+00 : f32
    %104 = vector.broadcast %cst_27 : f32 to vector<8x128xf32>
    %105 = arith.subf %104, %97 : vector<8x128xf32>
    %106 = arith.mulf %105, %103 : vector<8x128xf32>
    %107 = arith.mulf %97, %73 : vector<8x128xf32>
    %108 = arith.addf %106, %107 : vector<8x128xf32>
    %109 = arith.index_cast %c2_i32 : i32 to index
    %c0_28 = arith.constant 0 : index
    %c0_29 = arith.constant 0 : index
    %110 = vector.load %arg5[%109, %c0_28, %c0_29] : memref<8x8x128xf32, #tpu.memory_space<vmem>>, vector<1x8x128xf32>
    %111 = vector.shape_cast %110 : vector<1x8x128xf32> to vector<8x128xf32>
    %112 = vector.shape_cast %108 : vector<8x128xf32> to vector<1x8x128xf32>
    tpu.vector_store %arg5[%109, %c0_28, %c0_29], %112 {strides = array<i32>} : memref<8x8x128xf32, #tpu.memory_space<vmem>>, vector<1x8x128xf32>,
    %c3_i32 = arith.constant 3 : i32
    %113 = arith.index_cast %c3_i32 : i32 to index
    %c0_30 = arith.constant 0 : index
    %c0_31 = arith.constant 0 : index
    %114 = vector.load %arg2[%113, %c0_30, %c0_31] : memref<8x8x384xf32, #tpu.memory_space<vmem>>, vector<1x8x384xf32>
    %115 = vector.shape_cast %114 : vector<1x8x384xf32> to vector<8x384xf32>
    %cst_32 = arith.constant dense<0.000000e+00> : vector<8x384xf32>
    %116 = tpu.matmul %108, %3, %cst_32 {dimension_numbers = #tpu.dot_dimension_numbers<[1], [0], [0], [1], [0, 0, 1, 1], [], []>} : vector<8x128xf32>, vector<128x384xf32>, vector<8x384xf32> -> vector<8x384xf32>
    %117 = vector.extract_strided_slice %115 {offsets = [0, 0], sizes = [8, 128], strides = [1, 1]} : vector<8x384xf32> to vector<8x128xf32>
    %118 = vector.extract_strided_slice %116 {offsets = [0, 0], sizes = [8, 128], strides = [1, 1]} : vector<8x384xf32> to vector<8x128xf32>
    %119 = arith.addf %117, %118 : vector<8x128xf32>
    %120 = arith.negf %119 : vector<8x128xf32>
    %121 = math.exp %120 : vector<8x128xf32>
    %cst_33 = arith.constant 1.000000e+00 : f32
    %122 = vector.broadcast %cst_33 : f32 to vector<8x128xf32>
    %123 = arith.addf %122, %121 : vector<8x128xf32>
    %124 = arith.divf %122, %123 : vector<8x128xf32>
    %125 = vector.extract_strided_slice %115 {offsets = [0, 128], sizes = [8, 128], strides = [1, 1]} : vector<8x384xf32> to vector<8x128xf32>
    %126 = vector.extract_strided_slice %116 {offsets = [0, 128], sizes = [8, 128], strides = [1, 1]} : vector<8x384xf32> to vector<8x128xf32>
    %127 = arith.addf %125, %126 : vector<8x128xf32>
    %128 = arith.negf %127 : vector<8x128xf32>
    %129 = math.exp %128 : vector<8x128xf32>
    %cst_34 = arith.constant 1.000000e+00 : f32
    %130 = vector.broadcast %cst_34 : f32 to vector<8x128xf32>
    %131 = arith.addf %130, %129 : vector<8x128xf32>
    %132 = arith.divf %130, %131 : vector<8x128xf32>
    %133 = vector.extract_strided_slice %115 {offsets = [0, 256], sizes = [8, 128], strides = [1, 1]} : vector<8x384xf32> to vector<8x128xf32>
    %134 = vector.extract_strided_slice %116 {offsets = [0, 256], sizes = [8, 128], strides = [1, 1]} : vector<8x384xf32> to vector<8x128xf32>
    %135 = arith.addf %134, %6 : vector<8x128xf32>
    %136 = arith.mulf %124, %135 : vector<8x128xf32>
    %137 = arith.addf %133, %136 : vector<8x128xf32>
    %138 = math.tanh %137 : vector<8x128xf32>
    %cst_35 = arith.constant 1.000000e+00 : f32
    %139 = vector.broadcast %cst_35 : f32 to vector<8x128xf32>
    %140 = arith.subf %139, %132 : vector<8x128xf32>
    %141 = arith.mulf %140, %138 : vector<8x128xf32>
    %142 = arith.mulf %132, %108 : vector<8x128xf32>
    %143 = arith.addf %141, %142 : vector<8x128xf32>
    %144 = arith.index_cast %c3_i32 : i32 to index
    %c0_36 = arith.constant 0 : index
    %c0_37 = arith.constant 0 : index
    %145 = vector.load %arg5[%144, %c0_36, %c0_37] : memref<8x8x128xf32, #tpu.memory_space<vmem>>, vector<1x8x128xf32>
    %146 = vector.shape_cast %145 : vector<1x8x128xf32> to vector<8x128xf32>
    %147 = vector.shape_cast %143 : vector<8x128xf32> to vector<1x8x128xf32>
    tpu.vector_store %arg5[%144, %c0_36, %c0_37], %147 {strides = array<i32>} : memref<8x8x128xf32, #tpu.memory_space<vmem>>, vector<1x8x128xf32>,
    %c4_i32 = arith.constant 4 : i32
    %148 = arith.index_cast %c4_i32 : i32 to index
    %c0_38 = arith.constant 0 : index
    %c0_39 = arith.constant 0 : index
    %149 = vector.load %arg2[%148, %c0_38, %c0_39] : memref<8x8x384xf32, #tpu.memory_space<vmem>>, vector<1x8x384xf32>
    %150 = vector.shape_cast %149 : vector<1x8x384xf32> to vector<8x384xf32>
    %cst_40 = arith.constant dense<0.000000e+00> : vector<8x384xf32>
    %151 = tpu.matmul %143, %3, %cst_40 {dimension_numbers = #tpu.dot_dimension_numbers<[1], [0], [0], [1], [0, 0, 1, 1], [], []>} : vector<8x128xf32>, vector<128x384xf32>, vector<8x384xf32> -> vector<8x384xf32>
    %152 = vector.extract_strided_slice %150 {offsets = [0, 0], sizes = [8, 128], strides = [1, 1]} : vector<8x384xf32> to vector<8x128xf32>
    %153 = vector.extract_strided_slice %151 {offsets = [0, 0], sizes = [8, 128], strides = [1, 1]} : vector<8x384xf32> to vector<8x128xf32>
    %154 = arith.addf %152, %153 : vector<8x128xf32>
    %155 = arith.negf %154 : vector<8x128xf32>
    %156 = math.exp %155 : vector<8x128xf32>
    %cst_41 = arith.constant 1.000000e+00 : f32
    %157 = vector.broadcast %cst_41 : f32 to vector<8x128xf32>
    %158 = arith.addf %157, %156 : vector<8x128xf32>
    %159 = arith.divf %157, %158 : vector<8x128xf32>
    %160 = vector.extract_strided_slice %150 {offsets = [0, 128], sizes = [8, 128], strides = [1, 1]} : vector<8x384xf32> to vector<8x128xf32>
    %161 = vector.extract_strided_slice %151 {offsets = [0, 128], sizes = [8, 128], strides = [1, 1]} : vector<8x384xf32> to vector<8x128xf32>
    %162 = arith.addf %160, %161 : vector<8x128xf32>
    %163 = arith.negf %162 : vector<8x128xf32>
    %164 = math.exp %163 : vector<8x128xf32>
    %cst_42 = arith.constant 1.000000e+00 : f32
    %165 = vector.broadcast %cst_42 : f32 to vector<8x128xf32>
    %166 = arith.addf %165, %164 : vector<8x128xf32>
    %167 = arith.divf %165, %166 : vector<8x128xf32>
    %168 = vector.extract_strided_slice %150 {offsets = [0, 256], sizes = [8, 128], strides = [1, 1]} : vector<8x384xf32> to vector<8x128xf32>
    %169 = vector.extract_strided_slice %151 {offsets = [0, 256], sizes = [8, 128], strides = [1, 1]} : vector<8x384xf32> to vector<8x128xf32>
    %170 = arith.addf %169, %6 : vector<8x128xf32>
    %171 = arith.mulf %159, %170 : vector<8x128xf32>
    %172 = arith.addf %168, %171 : vector<8x128xf32>
    %173 = math.tanh %172 : vector<8x128xf32>
    %cst_43 = arith.constant 1.000000e+00 : f32
    %174 = vector.broadcast %cst_43 : f32 to vector<8x128xf32>
    %175 = arith.subf %174, %167 : vector<8x128xf32>
    %176 = arith.mulf %175, %173 : vector<8x128xf32>
    %177 = arith.mulf %167, %143 : vector<8x128xf32>
    %178 = arith.addf %176, %177 : vector<8x128xf32>
    %179 = arith.index_cast %c4_i32 : i32 to index
    %c0_44 = arith.constant 0 : index
    %c0_45 = arith.constant 0 : index
    %180 = vector.load %arg5[%179, %c0_44, %c0_45] : memref<8x8x128xf32, #tpu.memory_space<vmem>>, vector<1x8x128xf32>
    %181 = vector.shape_cast %180 : vector<1x8x128xf32> to vector<8x128xf32>
    %182 = vector.shape_cast %178 : vector<8x128xf32> to vector<1x8x128xf32>
    tpu.vector_store %arg5[%179, %c0_44, %c0_45], %182 {strides = array<i32>} : memref<8x8x128xf32, #tpu.memory_space<vmem>>, vector<1x8x128xf32>,
    %c5_i32 = arith.constant 5 : i32
    %183 = arith.index_cast %c5_i32 : i32 to index
    %c0_46 = arith.constant 0 : index
    %c0_47 = arith.constant 0 : index
    %184 = vector.load %arg2[%183, %c0_46, %c0_47] : memref<8x8x384xf32, #tpu.memory_space<vmem>>, vector<1x8x384xf32>
    %185 = vector.shape_cast %184 : vector<1x8x384xf32> to vector<8x384xf32>
    %cst_48 = arith.constant dense<0.000000e+00> : vector<8x384xf32>
    %186 = tpu.matmul %178, %3, %cst_48 {dimension_numbers = #tpu.dot_dimension_numbers<[1], [0], [0], [1], [0, 0, 1, 1], [], []>} : vector<8x128xf32>, vector<128x384xf32>, vector<8x384xf32> -> vector<8x384xf32>
    %187 = vector.extract_strided_slice %185 {offsets = [0, 0], sizes = [8, 128], strides = [1, 1]} : vector<8x384xf32> to vector<8x128xf32>
    %188 = vector.extract_strided_slice %186 {offsets = [0, 0], sizes = [8, 128], strides = [1, 1]} : vector<8x384xf32> to vector<8x128xf32>
    %189 = arith.addf %187, %188 : vector<8x128xf32>
    %190 = arith.negf %189 : vector<8x128xf32>
    %191 = math.exp %190 : vector<8x128xf32>
    %cst_49 = arith.constant 1.000000e+00 : f32
    %192 = vector.broadcast %cst_49 : f32 to vector<8x128xf32>
    %193 = arith.addf %192, %191 : vector<8x128xf32>
    %194 = arith.divf %192, %193 : vector<8x128xf32>
    %195 = vector.extract_strided_slice %185 {offsets = [0, 128], sizes = [8, 128], strides = [1, 1]} : vector<8x384xf32> to vector<8x128xf32>
    %196 = vector.extract_strided_slice %186 {offsets = [0, 128], sizes = [8, 128], strides = [1, 1]} : vector<8x384xf32> to vector<8x128xf32>
    %197 = arith.addf %195, %196 : vector<8x128xf32>
    %198 = arith.negf %197 : vector<8x128xf32>
    %199 = math.exp %198 : vector<8x128xf32>
    %cst_50 = arith.constant 1.000000e+00 : f32
    %200 = vector.broadcast %cst_50 : f32 to vector<8x128xf32>
    %201 = arith.addf %200, %199 : vector<8x128xf32>
    %202 = arith.divf %200, %201 : vector<8x128xf32>
    %203 = vector.extract_strided_slice %185 {offsets = [0, 256], sizes = [8, 128], strides = [1, 1]} : vector<8x384xf32> to vector<8x128xf32>
    %204 = vector.extract_strided_slice %186 {offsets = [0, 256], sizes = [8, 128], strides = [1, 1]} : vector<8x384xf32> to vector<8x128xf32>
    %205 = arith.addf %204, %6 : vector<8x128xf32>
    %206 = arith.mulf %194, %205 : vector<8x128xf32>
    %207 = arith.addf %203, %206 : vector<8x128xf32>
    %208 = math.tanh %207 : vector<8x128xf32>
    %cst_51 = arith.constant 1.000000e+00 : f32
    %209 = vector.broadcast %cst_51 : f32 to vector<8x128xf32>
    %210 = arith.subf %209, %202 : vector<8x128xf32>
    %211 = arith.mulf %210, %208 : vector<8x128xf32>
    %212 = arith.mulf %202, %178 : vector<8x128xf32>
    %213 = arith.addf %211, %212 : vector<8x128xf32>
    %214 = arith.index_cast %c5_i32 : i32 to index
    %c0_52 = arith.constant 0 : index
    %c0_53 = arith.constant 0 : index
    %215 = vector.load %arg5[%214, %c0_52, %c0_53] : memref<8x8x128xf32, #tpu.memory_space<vmem>>, vector<1x8x128xf32>
    %216 = vector.shape_cast %215 : vector<1x8x128xf32> to vector<8x128xf32>
    %217 = vector.shape_cast %213 : vector<8x128xf32> to vector<1x8x128xf32>
    tpu.vector_store %arg5[%214, %c0_52, %c0_53], %217 {strides = array<i32>} : memref<8x8x128xf32, #tpu.memory_space<vmem>>, vector<1x8x128xf32>,
    %c6_i32 = arith.constant 6 : i32
    %218 = arith.index_cast %c6_i32 : i32 to index
    %c0_54 = arith.constant 0 : index
    %c0_55 = arith.constant 0 : index
    %219 = vector.load %arg2[%218, %c0_54, %c0_55] : memref<8x8x384xf32, #tpu.memory_space<vmem>>, vector<1x8x384xf32>
    %220 = vector.shape_cast %219 : vector<1x8x384xf32> to vector<8x384xf32>
    %cst_56 = arith.constant dense<0.000000e+00> : vector<8x384xf32>
    %221 = tpu.matmul %213, %3, %cst_56 {dimension_numbers = #tpu.dot_dimension_numbers<[1], [0], [0], [1], [0, 0, 1, 1], [], []>} : vector<8x128xf32>, vector<128x384xf32>, vector<8x384xf32> -> vector<8x384xf32>
    %222 = vector.extract_strided_slice %220 {offsets = [0, 0], sizes = [8, 128], strides = [1, 1]} : vector<8x384xf32> to vector<8x128xf32>
    %223 = vector.extract_strided_slice %221 {offsets = [0, 0], sizes = [8, 128], strides = [1, 1]} : vector<8x384xf32> to vector<8x128xf32>
    %224 = arith.addf %222, %223 : vector<8x128xf32>
    %225 = arith.negf %224 : vector<8x128xf32>
    %226 = math.exp %225 : vector<8x128xf32>
    %cst_57 = arith.constant 1.000000e+00 : f32
    %227 = vector.broadcast %cst_57 : f32 to vector<8x128xf32>
    %228 = arith.addf %227, %226 : vector<8x128xf32>
    %229 = arith.divf %227, %228 : vector<8x128xf32>
    %230 = vector.extract_strided_slice %220 {offsets = [0, 128], sizes = [8, 128], strides = [1, 1]} : vector<8x384xf32> to vector<8x128xf32>
    %231 = vector.extract_strided_slice %221 {offsets = [0, 128], sizes = [8, 128], strides = [1, 1]} : vector<8x384xf32> to vector<8x128xf32>
    %232 = arith.addf %230, %231 : vector<8x128xf32>
    %233 = arith.negf %232 : vector<8x128xf32>
    %234 = math.exp %233 : vector<8x128xf32>
    %cst_58 = arith.constant 1.000000e+00 : f32
    %235 = vector.broadcast %cst_58 : f32 to vector<8x128xf32>
    %236 = arith.addf %235, %234 : vector<8x128xf32>
    %237 = arith.divf %235, %236 : vector<8x128xf32>
    %238 = vector.extract_strided_slice %220 {offsets = [0, 256], sizes = [8, 128], strides = [1, 1]} : vector<8x384xf32> to vector<8x128xf32>
    %239 = vector.extract_strided_slice %221 {offsets = [0, 256], sizes = [8, 128], strides = [1, 1]} : vector<8x384xf32> to vector<8x128xf32>
    %240 = arith.addf %239, %6 : vector<8x128xf32>
    %241 = arith.mulf %229, %240 : vector<8x128xf32>
    %242 = arith.addf %238, %241 : vector<8x128xf32>
    %243 = math.tanh %242 : vector<8x128xf32>
    %cst_59 = arith.constant 1.000000e+00 : f32
    %244 = vector.broadcast %cst_59 : f32 to vector<8x128xf32>
    %245 = arith.subf %244, %237 : vector<8x128xf32>
    %246 = arith.mulf %245, %243 : vector<8x128xf32>
    %247 = arith.mulf %237, %213 : vector<8x128xf32>
    %248 = arith.addf %246, %247 : vector<8x128xf32>
    %249 = arith.index_cast %c6_i32 : i32 to index
    %c0_60 = arith.constant 0 : index
    %c0_61 = arith.constant 0 : index
    %250 = vector.load %arg5[%249, %c0_60, %c0_61] : memref<8x8x128xf32, #tpu.memory_space<vmem>>, vector<1x8x128xf32>
    %251 = vector.shape_cast %250 : vector<1x8x128xf32> to vector<8x128xf32>
    %252 = vector.shape_cast %248 : vector<8x128xf32> to vector<1x8x128xf32>
    tpu.vector_store %arg5[%249, %c0_60, %c0_61], %252 {strides = array<i32>} : memref<8x8x128xf32, #tpu.memory_space<vmem>>, vector<1x8x128xf32>,
    %c7_i32 = arith.constant 7 : i32
    %253 = arith.index_cast %c7_i32 : i32 to index
    %c0_62 = arith.constant 0 : index
    %c0_63 = arith.constant 0 : index
    %254 = vector.load %arg2[%253, %c0_62, %c0_63] : memref<8x8x384xf32, #tpu.memory_space<vmem>>, vector<1x8x384xf32>
    %255 = vector.shape_cast %254 : vector<1x8x384xf32> to vector<8x384xf32>
    %cst_64 = arith.constant dense<0.000000e+00> : vector<8x384xf32>
    %256 = tpu.matmul %248, %3, %cst_64 {dimension_numbers = #tpu.dot_dimension_numbers<[1], [0], [0], [1], [0, 0, 1, 1], [], []>} : vector<8x128xf32>, vector<128x384xf32>, vector<8x384xf32> -> vector<8x384xf32>
    %257 = vector.extract_strided_slice %255 {offsets = [0, 0], sizes = [8, 128], strides = [1, 1]} : vector<8x384xf32> to vector<8x128xf32>
    %258 = vector.extract_strided_slice %256 {offsets = [0, 0], sizes = [8, 128], strides = [1, 1]} : vector<8x384xf32> to vector<8x128xf32>
    %259 = arith.addf %257, %258 : vector<8x128xf32>
    %260 = arith.negf %259 : vector<8x128xf32>
    %261 = math.exp %260 : vector<8x128xf32>
    %cst_65 = arith.constant 1.000000e+00 : f32
    %262 = vector.broadcast %cst_65 : f32 to vector<8x128xf32>
    %263 = arith.addf %262, %261 : vector<8x128xf32>
    %264 = arith.divf %262, %263 : vector<8x128xf32>
    %265 = vector.extract_strided_slice %255 {offsets = [0, 128], sizes = [8, 128], strides = [1, 1]} : vector<8x384xf32> to vector<8x128xf32>
    %266 = vector.extract_strided_slice %256 {offsets = [0, 128], sizes = [8, 128], strides = [1, 1]} : vector<8x384xf32> to vector<8x128xf32>
    %267 = arith.addf %265, %266 : vector<8x128xf32>
    %268 = arith.negf %267 : vector<8x128xf32>
    %269 = math.exp %268 : vector<8x128xf32>
    %cst_66 = arith.constant 1.000000e+00 : f32
    %270 = vector.broadcast %cst_66 : f32 to vector<8x128xf32>
    %271 = arith.addf %270, %269 : vector<8x128xf32>
    %272 = arith.divf %270, %271 : vector<8x128xf32>
    %273 = vector.extract_strided_slice %255 {offsets = [0, 256], sizes = [8, 128], strides = [1, 1]} : vector<8x384xf32> to vector<8x128xf32>
    %274 = vector.extract_strided_slice %256 {offsets = [0, 256], sizes = [8, 128], strides = [1, 1]} : vector<8x384xf32> to vector<8x128xf32>
    %275 = arith.addf %274, %6 : vector<8x128xf32>
    %276 = arith.mulf %264, %275 : vector<8x128xf32>
    %277 = arith.addf %273, %276 : vector<8x128xf32>
    %278 = math.tanh %277 : vector<8x128xf32>
    %cst_67 = arith.constant 1.000000e+00 : f32
    %279 = vector.broadcast %cst_67 : f32 to vector<8x128xf32>
    %280 = arith.subf %279, %272 : vector<8x128xf32>
    %281 = arith.mulf %280, %278 : vector<8x128xf32>
    %282 = arith.mulf %272, %248 : vector<8x128xf32>
    %283 = arith.addf %281, %282 : vector<8x128xf32>
    %284 = arith.index_cast %c7_i32 : i32 to index
    %c0_68 = arith.constant 0 : index
    %c0_69 = arith.constant 0 : index
    %285 = vector.load %arg5[%284, %c0_68, %c0_69] : memref<8x8x128xf32, #tpu.memory_space<vmem>>, vector<1x8x128xf32>
    %286 = vector.shape_cast %285 : vector<1x8x128xf32> to vector<8x128xf32>
    %287 = vector.shape_cast %283 : vector<8x128xf32> to vector<1x8x128xf32>
    tpu.vector_store %arg5[%284, %c0_68, %c0_69], %287 {strides = array<i32>} : memref<8x8x128xf32, #tpu.memory_space<vmem>>, vector<1x8x128xf32>,
    %c8_i32 = arith.constant 8 : i32
    %c0_i32_70 = arith.constant 0 : i32
    %288 = arith.cmpi slt, %arg1, %c0_i32_70 : i32
    %289 = arith.extui %288 : i1 to i32
    %c0_i32_71 = arith.constant 0 : i32
    %290 = arith.cmpi ne, %289, %c0_i32_71 : i32
    scf.if %290 {
      %c0_74 = arith.constant 0 : index
      %c0_75 = arith.constant 0 : index
      %294 = vector.load %arg7[%c0_74, %c0_75] : memref<8x128xf32, #tpu.memory_space<vmem>>, vector<8x128xf32>
      tpu.vector_store %arg7[%c0_74, %c0_75], %283 {strides = array<i32>} : memref<8x128xf32, #tpu.memory_space<vmem>>, vector<8x128xf32>,
    } else {
    }
    %c0_i32_72 = arith.constant 0 : i32
    %291 = arith.cmpi eq, %arg1, %c0_i32_72 : i32
    %292 = arith.extui %291 : i1 to i32
    %c0_i32_73 = arith.constant 0 : i32
    %293 = arith.cmpi ne, %292, %c0_i32_73 : i32
    scf.if %293 {
      %c0_74 = arith.constant 0 : index
      %c0_75 = arith.constant 0 : index
      %294 = vector.load %arg6[%c0_74, %c0_75] : memref<8x128xf32, #tpu.memory_space<vmem>>, vector<8x128xf32>
      tpu.vector_store %arg6[%c0_74, %c0_75], %283 {strides = array<i32>} : memref<8x128xf32, #tpu.memory_space<vmem>>, vector<8x128xf32>,
    } else {
    }
    return
  }
  func.func @transform_0(%arg0: i32, %arg1: i32) -> (i32, i32, i32) {
    %c0_i32 = arith.constant 0 : i32
    %c0_i32_0 = arith.constant 0 : i32
    return %arg1, %arg0, %c0_i32 : i32, i32, i32
  }
  func.func @transform_1(%arg0: i32, %arg1: i32) -> (i32, i32) {
    %c0_i32 = arith.constant 0 : i32
    %c0_i32_0 = arith.constant 0 : i32
    %c0_i32_1 = arith.constant 0 : i32
    return %c0_i32, %c0_i32_0 : i32, i32
  }
  func.func @transform_2(%arg0: i32, %arg1: i32) -> (i32, i32) {
    %c0_i32 = arith.constant 0 : i32
    %c0_i32_0 = arith.constant 0 : i32
    %c0_i32_1 = arith.constant 0 : i32
    return %c0_i32, %c0_i32_0 : i32, i32
  }
  func.func @transform_3(%arg0: i32, %arg1: i32) -> (i32, i32, i32) {
    %c0_i32 = arith.constant 0 : i32
    %c0_i32_0 = arith.constant 0 : i32
    return %arg1, %arg0, %c0_i32 : i32, i32, i32
  }
  func.func @transform_4(%arg0: i32, %arg1: i32) -> (i32, i32) {
    %c0_i32 = arith.constant 0 : i32
    %c0_i32_0 = arith.constant 0 : i32
    return %arg0, %c0_i32 : i32, i32
  }
}

</mosaic_0001>

<llo_original>
// kernel: tpu_custom_call.1
$region0: #{tpu_custom_call.1}
  #allocation0 [shape = 'u32[]', space=smem, size = 0x4, offset = 0x4, fixed_abs, tag = 'smem constant byte address 0x4 - core index']
  #allocation1 [shape = 'u32[144,128]{1,0:T(1,128)}', space=vmem, size = 0x12000, scoped, tag = 'internal scratch']
  #allocation2 [shape = 'f32[8,128]{1,0:T(8,128)}', space=vmem, size = 0x1000, scoped, tag = 'scratch operand']
  %s0 = inlined_call_operand.hbm [shape: f32[8,8,384], index: 0, kind: input, shape index: {}]
  %s1 = inlined_call_operand.hbm [shape: f32[128,384], index: 1, kind: input, shape index: {}]
  %s2 = inlined_call_operand.vmem [shape: f32[1,128], index: 2, kind: input, shape index: {}]
  %s3 = inlined_call_operand.hbm [shape: f32[8,8,128], index: 3, kind: output, shape index: {0}]
  %s4 = inlined_call_operand.hbm [shape: f32[8,128], index: 4, kind: output, shape index: {1}]
  %5 = xla_tuple %s3, %s4
  %s6 = sld [smem:[#allocation0]]
  $region50: #{tpu_custom_call.1} parent=0
    _
  %s8 = ssub.s32 1, %s6
  %s9 = scalar_select 0, %s8, %s6
  $region1: #{tpu_custom_call.1} parent=0
    #allocation3 [shape = 'u8[98304]{0}', space=vmem, size = 0x18000, scoped, tag = 'input window, operand 0, single buffered']
    #allocation4 [shape = 's32[1]{0}', space=sflag, size = 0x4, scoped, tag = 'scoped memory for tpu_custom_call.1']
    #allocation5 [shape = 's32[1]{0}', space=sflag, size = 0x4, scoped, tag = 'scoped memory for tpu_custom_call.1']
    #allocation6 [shape = 'u8[196608]{0}', space=vmem, size = 0x30000, scoped, tag = 'input window, operand 1, single buffered']
    #allocation7 [shape = 's32[1]{0}', space=sflag, size = 0x4, scoped, tag = 'scoped memory for tpu_custom_call.1']
    #allocation8 [shape = 'u8[32768]{0}', space=vmem, size = 0x8000, scoped, tag = 'output window, operand 0, single buffered']
    #allocation9 [shape = 'u8[4096]{0}', space=vmem, size = 0x1000, scoped, tag = 'output window, operand 1, single buffered']
    #allocation10 [shape = 's32[1]{0}', space=sflag, size = 0x4, scoped, tag = 'scoped memory for tpu_custom_call.1']
    %10 = vsyncpa [#allocation4], 0
    %11 = vsyncpa [#allocation7], 0
    %12 = vsyncpa [#allocation5], 0
    %13 = vsyncpa [#allocation10], 0
    // Predicated region
    $region2: #{tpu_custom_call.1} parent=1 // pred_check
      _
    $region3: #{tpu_custom_call.1} parent=1 // pred_check_branch
      %15 = sbr.rel (0) target = $region5
    $region4: #{tpu_custom_call.1} parent=1 // pred_region
      %s17 = ssub.s32 3072, 3072
      %18 = vsyncadd [#allocation4], %s17
      %s19 = sshll.u32 [#allocation3], 4
      %s20 = int_to_ptr.vmem [resolvable:$true] %s19
      %25 = dma.hbm_to_vmem [thread:$0]  %s0, 3072, %s20, [#allocation4], 384, 384, 24
    $region5: #{tpu_custom_call.1} parent=1 // pred_fallthru
      _
    // Predicated region
    $region6: #{tpu_custom_call.1} parent=1 // pred_check
      _
    $region7: #{tpu_custom_call.1} parent=1 // pred_check_branch
      %27 = sbr.rel (0) target = $region9
    $region8: #{tpu_custom_call.1} parent=1 // pred_region
      %s29 = ssub.s32 6144, 6144
      %30 = vsyncadd [#allocation7], %s29
      %s31 = sshll.u32 [#allocation6], 4
      %s32 = int_to_ptr.vmem [resolvable:$true] %s31
      %37 = dma.hbm_to_vmem [thread:$0]  %s1, 6144, %s32, [#allocation7], 384, 384, 24
    $region9: #{tpu_custom_call.1} parent=1 // pred_fallthru
      _
    // Predicated region
    $region10: #{tpu_custom_call.1} parent=1 // pred_check
      _
    $region11: #{tpu_custom_call.1} parent=1 // pred_check_branch
      %39 = sbr.rel (0) target = $region13
    $region12: #{tpu_custom_call.1} parent=1 // pred_region
      _
    $region13: #{tpu_custom_call.1} parent=1 // pred_fallthru
      _
    // Predicated region
    $region14: #{tpu_custom_call.1} parent=1 // pred_check
      _
    $region15: #{tpu_custom_call.1} parent=1 // pred_check_branch
      %41 = sbr.rel (0) target = $region17
    $region16: #{tpu_custom_call.1} parent=1 // pred_region
      %42 = dma.done [#allocation4], 3072
    $region17: #{tpu_custom_call.1} parent=1 // pred_fallthru
      _
    // Predicated region
    $region18: #{tpu_custom_call.1} parent=1 // pred_check
      _
    $region19: #{tpu_custom_call.1} parent=1 // pred_check_branch
      %44 = sbr.rel (0) target = $region21
    $region20: #{tpu_custom_call.1} parent=1 // pred_region
      %45 = dma.done [#allocation7], 6144
    $region21: #{tpu_custom_call.1} parent=1 // pred_fallthru
      _
    %p46 = scmp.eq.s32.totalorder 0, 0
    // Predicated region
    $region22: #{tpu_custom_call.1} parent=1 // pred_check
      %p47 = pneg %p46
    $region23: #{tpu_custom_call.1} parent=1 // pred_check_branch
      %49 = sbr.rel (%p47) target = $region25
    $region24: #{tpu_custom_call.1} parent=1 // pred_region
      %50 = vst [vmem:[#allocation2] sm:$0xff] 0.0
    $region25: #{tpu_custom_call.1} parent=1 // pred_fallthru
      _
    %v51 = vld [vmem:[#allocation6] sm:$0xff]
    %v52 = vld [vmem:[#allocation6 + $0x8] sm:$0xff]
    %v53 = vld [vmem:[#allocation6 + $0x10] sm:$0xff]
    %v54 = vld [vmem:[#allocation6 + $0x18] sm:$0xff]
    %v55 = vld [vmem:[#allocation6 + $0x20] sm:$0xff]
    %v56 = vld [vmem:[#allocation6 + $0x28] sm:$0xff]
    %v57 = vld [vmem:[#allocation6 + $0x30] sm:$0xff]
    %v58 = vld [vmem:[#allocation6 + $0x38] sm:$0xff]
    %v59 = vld [vmem:[#allocation6 + $0x40] sm:$0xff]
    %v60 = vld [vmem:[#allocation6 + $0x48] sm:$0xff]
    %v61 = vld [vmem:[#allocation6 + $0x50] sm:$0xff]
    %v62 = vld [vmem:[#allocation6 + $0x58] sm:$0xff]
    %v63 = vld [vmem:[#allocation6 + $0x60] sm:$0xff]
    %v64 = vld [vmem:[#allocation6 + $0x68] sm:$0xff]
    %v65 = vld [vmem:[#allocation6 + $0x70] sm:$0xff]
    %v66 = vld [vmem:[#allocation6 + $0x78] sm:$0xff]
    %v67 = vld [vmem:[#allocation6 + $0x80] sm:$0xff]
    %v68 = vld [vmem:[#allocation6 + $0x88] sm:$0xff]
    %v69 = vld [vmem:[#allocation6 + $0x90] sm:$0xff]
    %v70 = vld [vmem:[#allocation6 + $0x98] sm:$0xff]
    %v71 = vld [vmem:[#allocation6 + $0xa0] sm:$0xff]
    %v72 = vld [vmem:[#allocation6 + $0xa8] sm:$0xff]
    %v73 = vld [vmem:[#allocation6 + $0xb0] sm:$0xff]
    %v74 = vld [vmem:[#allocation6 + $0xb8] sm:$0xff]
    %v75 = vld [vmem:[#allocation6 + $0xc0] sm:$0xff]
    %v76 = vld [vmem:[#allocation6 + $0xc8] sm:$0xff]
    %v77 = vld [vmem:[#allocation6 + $0xd0] sm:$0xff]
    %v78 = vld [vmem:[#allocation6 + $0xd8] sm:$0xff]
    %v79 = vld [vmem:[#allocation6 + $0xe0] sm:$0xff]
    %v80 = vld [vmem:[#allocation6 + $0xe8] sm:$0xff]
    %v81 = vld [vmem:[#allocation6 + $0xf0] sm:$0xff]
    %v82 = vld [vmem:[#allocation6 + $0xf8] sm:$0xff]
    %v83 = vld [vmem:[#allocation6 + $0x100] sm:$0xff]
    %v84 = vld [vmem:[#allocation6 + $0x108] sm:$0xff]
    %v85 = vld [vmem:[#allocation6 + $0x110] sm:$0xff]
    %v86 = vld [vmem:[#allocation6 + $0x118] sm:$0xff]
    %v87 = vld [vmem:[#allocation6 + $0x120] sm:$0xff]
    %v88 = vld [vmem:[#allocation6 + $0x128] sm:$0xff]
    %v89 = vld [vmem:[#allocation6 + $0x130] sm:$0xff]
    %v90 = vld [vmem:[#allocation6 + $0x138] sm:$0xff]
    %v91 = vld [vmem:[#allocation6 + $0x140] sm:$0xff]
    %v92 = vld [vmem:[#allocation6 + $0x148] sm:$0xff]
    %v93 = vld [vmem:[#allocation6 + $0x150] sm:$0xff]
    %v94 = vld [vmem:[#allocation6 + $0x158] sm:$0xff]
    %v95 = vld [vmem:[#allocation6 + $0x160] sm:$0xff]
    %v96 = vld [vmem:[#allocation6 + $0x168] sm:$0xff]
    %v97 = vld [vmem:[#allocation6 + $0x170] sm:$0xff]
    %v98 = vld [vmem:[#allocation6 + $0x178] sm:$0xff]
    %v99 = vld [vmem:[%s2] sm:$0x1]
    %v101 = vlaneseq
    %v102 = vshrl.u32 %v101, 7
    %v103 = vsub.s32 0, %v102
    %v104 = vrot.slane %v99, %v103
    %v106 = vld [vmem:[#allocation2] sm:$0xff]
    %v107 = vld [vmem:[#allocation3] sm:$0xff]
    %v108 = vld [vmem:[#allocation3 + $0x8] sm:$0xff]
    %v109 = vld [vmem:[#allocation3 + $0x10] sm:$0xff]
    %110 = vmatprep.subr.mxu0 %v97
    %111 = vmatpush1.msra.mxu0 %v96
    %112 = vmatprep.subr.mxu0 %v94
    %113 = vmatpush1.msra.mxu0 %v93
    %114 = vmatprep.subr.mxu0 %v91
    %115 = vmatpush1.msra.mxu0 %v90
    %116 = vmatprep.subr.mxu0 %v88
    %117 = vmatpush1.msra.mxu0 %v87
    %118 = vmatprep.subr.mxu0 %v85
    %119 = vmatpush1.msra.mxu0 %v84
    %120 = vmatprep.subr.mxu0 %v82
    %121 = vmatpush1.msra.mxu0 %v81
    %122 = vmatprep.subr.mxu0 %v79
    %123 = vmatpush1.msra.mxu0 %v78
    %124 = vmatprep.subr.mxu0 %v76
    %125 = vmatpush1.msra.mxu0 %v75
    %126 = vmatprep.subr.mxu0 %v73
    %127 = vmatpush1.msra.mxu0 %v72
    %128 = vmatprep.subr.mxu0 %v70
    %129 = vmatpush1.msra.mxu0 %v69
    %130 = vmatprep.subr.mxu0 %v67
    %131 = vmatpush1.msra.mxu0 %v66
    %132 = vmatprep.subr.mxu0 %v64
    %133 = vmatpush1.msra.mxu0 %v63
    %134 = vmatprep.subr.mxu0 %v61
    %135 = vmatpush1.msra.mxu0 %v60
    %136 = vmatprep.subr.mxu0 %v58
    %137 = vmatpush1.msra.mxu0 %v57
    %138 = vmatprep.subr.mxu0 %v55
    %139 = vmatpush1.msra.mxu0 %v54
    %140 = vmatprep.subr.mxu0 %v52
    %141 = vmatpush1.msra.mxu0 %v51
    %142 = vmatprep.subr.mxu0 0.0
    %143 = vmatpush2.msra.mxu0 0.0
    %144 = vmatprep.subr.mxu0 0.0
    %145 = vmatpush2.msra.mxu0 0.0
    %146 = vmatprep.subr.mxu0 0.0
    %147 = vmatpush2.msra.mxu0 0.0
    %148 = vmatprep.subr.mxu0 0.0
    %149 = vmatpush2.msra.mxu0 0.0
    %150 = vmatprep.subr.mxu0 0.0
    %151 = vmatpush2.msra.mxu0 0.0
    %152 = vmatprep.subr.mxu0 0.0
    %153 = vmatpush2.msra.mxu0 0.0
    %154 = vmatprep.subr.mxu0 0.0
    %155 = vmatpush2.msra.mxu0 0.0
    %156 = vmatprep.subr.mxu0 0.0
    %157 = vmatpush2.msra.mxu0 0.0
    %158 = vmatprep.subr.mxu0 0.0
    %159 = vmatpush2.msra.mxu0 0.0
    %160 = vmatprep.subr.mxu0 0.0
    %161 = vmatpush2.msra.mxu0 0.0
    %162 = vmatprep.subr.mxu0 0.0
    %163 = vmatpush2.msra.mxu0 0.0
    %164 = vmatprep.subr.mxu0 0.0
    %165 = vmatpush2.msra.mxu0 0.0
    %166 = vmatprep.subr.mxu0 0.0
    %167 = vmatpush2.msra.mxu0 0.0
    %168 = vmatprep.subr.mxu0 0.0
    %169 = vmatpush2.msra.mxu0 0.0
    %170 = vmatprep.subr.mxu0 0.0
    %171 = vmatpush2.msra.mxu0 0.0
    %172 = vmatprep.subr.mxu0 0.0
    %173 = vmatpush2.msra.mxu0 0.0
    %174 = vmatprep.mubr.f32.mxu0 0.0
    %175 = vmatmul.mubr.f32.gmra.mxu0 %v106
    %v176 = vpop.f32.mrf.mxu0
    %v177 = vadd.f32 0.0, %v176
    %v178 = vpop.f32.mrf.mxu0
    %v179 = vadd.f32 0.0, %v178
    %180 = vdwg.mxu0
    %181 = vmatprep.subr.mxu0 0.0
    %182 = vmatpush1.msra.mxu0 %v98
    %183 = vmatprep.subr.mxu0 0.0
    %184 = vmatpush1.msra.mxu0 %v95
    %185 = vmatprep.subr.mxu0 0.0
    %186 = vmatpush1.msra.mxu0 %v92
    %187 = vmatprep.subr.mxu0 0.0
    %188 = vmatpush1.msra.mxu0 %v89
    %189 = vmatprep.subr.mxu0 0.0
    %190 = vmatpush1.msra.mxu0 %v86
    %191 = vmatprep.subr.mxu0 0.0
    %192 = vmatpush1.msra.mxu0 %v83
    %193 = vmatprep.subr.mxu0 0.0
    %194 = vmatpush1.msra.mxu0 %v80
    %195 = vmatprep.subr.mxu0 0.0
    %196 = vmatpush1.msra.mxu0 %v77
    %197 = vmatprep.subr.mxu0 0.0
    %198 = vmatpush1.msra.mxu0 %v74
    %199 = vmatprep.subr.mxu0 0.0
    %200 = vmatpush1.msra.mxu0 %v71
    %201 = vmatprep.subr.mxu0 0.0
    %202 = vmatpush1.msra.mxu0 %v68
    %203 = vmatprep.subr.mxu0 0.0
    %204 = vmatpush1.msra.mxu0 %v65
    %205 = vmatprep.subr.mxu0 0.0
    %206 = vmatpush1.msra.mxu0 %v62
    %207 = vmatprep.subr.mxu0 0.0
    %208 = vmatpush1.msra.mxu0 %v59
    %209 = vmatprep.subr.mxu0 0.0
    %210 = vmatpush1.msra.mxu0 %v56
    %211 = vmatprep.subr.mxu0 0.0
    %212 = vmatpush1.msra.mxu0 %v53
    %213 = vmatprep.subr.mxu0 0.0
    %214 = vmatpush2.msra.mxu0 0.0
    %215 = vmatprep.subr.mxu0 0.0
    %216 = vmatpush2.msra.mxu0 0.0
    %217 = vmatprep.subr.mxu0 0.0
    %218 = vmatpush2.msra.mxu0 0.0
    %219 = vmatprep.subr.mxu0 0.0
    %220 = vmatpush2.msra.mxu0 0.0
    %221 = vmatprep.subr.mxu0 0.0
    %222 = vmatpush2.msra.mxu0 0.0
    %223 = vmatprep.subr.mxu0 0.0
    %224 = vmatpush2.msra.mxu0 0.0
    %225 = vmatprep.subr.mxu0 0.0
    %226 = vmatpush2.msra.mxu0 0.0
    %227 = vmatprep.subr.mxu0 0.0
    %228 = vmatpush2.msra.mxu0 0.0
    %229 = vmatprep.subr.mxu0 0.0
    %230 = vmatpush2.msra.mxu0 0.0
    %231 = vmatprep.subr.mxu0 0.0
    %232 = vmatpush2.msra.mxu0 0.0
    %233 = vmatprep.subr.mxu0 0.0
    %234 = vmatpush2.msra.mxu0 0.0
    %235 = vmatprep.subr.mxu0 0.0
    %236 = vmatpush2.msra.mxu0 0.0
    %237 = vmatprep.subr.mxu0 0.0
    %238 = vmatpush2.msra.mxu0 0.0
    %239 = vmatprep.subr.mxu0 0.0
    %240 = vmatpush2.msra.mxu0 0.0
    %241 = vmatprep.subr.mxu0 0.0
    %242 = vmatpush2.msra.mxu0 0.0
    %243 = vmatprep.subr.mxu0 0.0
    %244 = vmatpush2.msra.mxu0 0.0
    %245 = vmatprep.mubr.f32.mxu0 0.0
    %246 = vmatmul.mubr.f32.gmra.mxu0 %v106
    %v247 = vpop.f32.mrf.mxu0
    %v248 = vadd.f32 0.0, %v247
    %v249 = vpop.f32.mrf.mxu0
    %250 = vdwg.mxu0
    %v251 = vadd.f32 %v107, %v177
    %v252 = vxor.u32 %v251, 2147483648
    %v253 = vmul.f32 %v252, 1.442695
    %v254 = vpow.pop %v253
    %v255 = vadd.f32 %v254, 1.0
    %v256 = vrcp.pop %v255
    %v257 = vmul.f32 1.0, %v256
    %v258 = vadd.f32 %v108, %v179
    %v259 = vxor.u32 %v258, 2147483648
    %v260 = vmul.f32 %v259, 1.442695
    %v261 = vpow.pop %v260
    %v262 = vadd.f32 %v261, 1.0
    %v263 = vrcp.pop %v262
    %v264 = vmul.f32 1.0, %v263
    %v265 = vadd.f32 %v248, %v104
    %v266 = vmul.f32 %v257, %v265
    %v267 = vadd.f32 %v109, %v266
    %v268 = vtanh.pop %v267
    %v269 = vsub.f32 1.0, %v264
    %v270 = vmul.f32 %v269, %v268
    %v271 = vmul.f32 %v264, %v106
    %v272 = vadd.f32 %v270, %v271
    %273 = vst [vmem:[#allocation8] sm:$0xff] %v272
    %s274 = scalar_lea.vmem [#allocation3], 24
    %v275 = vld [vmem:[%s274] sm:$0xff]
    %v276 = vld [vmem:[%s274 + $0x8] sm:$0xff]
    %v277 = vld [vmem:[%s274 + $0x10] sm:$0xff]
    %278 = vmatprep.subr.mxu0 %v97
    %279 = vmatpush1.msra.mxu0 %v96
    %280 = vmatprep.subr.mxu0 %v94
    %281 = vmatpush1.msra.mxu0 %v93
    %282 = vmatprep.subr.mxu0 %v91
    %283 = vmatpush1.msra.mxu0 %v90
    %284 = vmatprep.subr.mxu0 %v88
    %285 = vmatpush1.msra.mxu0 %v87
    %286 = vmatprep.subr.mxu0 %v85
    %287 = vmatpush1.msra.mxu0 %v84
    %288 = vmatprep.subr.mxu0 %v82
    %289 = vmatpush1.msra.mxu0 %v81
    %290 = vmatprep.subr.mxu0 %v79
    %291 = vmatpush1.msra.mxu0 %v78
    %292 = vmatprep.subr.mxu0 %v76
    %293 = vmatpush1.msra.mxu0 %v75
    %294 = vmatprep.subr.mxu0 %v73
    %295 = vmatpush1.msra.mxu0 %v72
    %296 = vmatprep.subr.mxu0 %v70
    %297 = vmatpush1.msra.mxu0 %v69
    %298 = vmatprep.subr.mxu0 %v67
    %299 = vmatpush1.msra.mxu0 %v66
    %300 = vmatprep.subr.mxu0 %v64
    %301 = vmatpush1.msra.mxu0 %v63
    %302 = vmatprep.subr.mxu0 %v61
    %303 = vmatpush1.msra.mxu0 %v60
    %304 = vmatprep.subr.mxu0 %v58
    %305 = vmatpush1.msra.mxu0 %v57
    %306 = vmatprep.subr.mxu0 %v55
    %307 = vmatpush1.msra.mxu0 %v54
    %308 = vmatprep.subr.mxu0 %v52
    %309 = vmatpush1.msra.mxu0 %v51
    %310 = vmatprep.subr.mxu0 0.0
    %311 = vmatpush2.msra.mxu0 0.0
    %312 = vmatprep.subr.mxu0 0.0
    %313 = vmatpush2.msra.mxu0 0.0
    %314 = vmatprep.subr.mxu0 0.0
    %315 = vmatpush2.msra.mxu0 0.0
    %316 = vmatprep.subr.mxu0 0.0
    %317 = vmatpush2.msra.mxu0 0.0
    %318 = vmatprep.subr.mxu0 0.0
    %319 = vmatpush2.msra.mxu0 0.0
    %320 = vmatprep.subr.mxu0 0.0
    %321 = vmatpush2.msra.mxu0 0.0
    %322 = vmatprep.subr.mxu0 0.0
    %323 = vmatpush2.msra.mxu0 0.0
    %324 = vmatprep.subr.mxu0 0.0
    %325 = vmatpush2.msra.mxu0 0.0
    %326 = vmatprep.subr.mxu0 0.0
    %327 = vmatpush2.msra.mxu0 0.0
    %328 = vmatprep.subr.mxu0 0.0
    %329 = vmatpush2.msra.mxu0 0.0
    %330 = vmatprep.subr.mxu0 0.0
    %331 = vmatpush2.msra.mxu0 0.0
    %332 = vmatprep.subr.mxu0 0.0
    %333 = vmatpush2.msra.mxu0 0.0
    %334 = vmatprep.subr.mxu0 0.0
    %335 = vmatpush2.msra.mxu0 0.0
    %336 = vmatprep.subr.mxu0 0.0
    %337 = vmatpush2.msra.mxu0 0.0
    %338 = vmatprep.subr.mxu0 0.0
    %339 = vmatpush2.msra.mxu0 0.0
    %340 = vmatprep.subr.mxu0 0.0
    %341 = vmatpush2.msra.mxu0 0.0
    %342 = vmatprep.mubr.f32.mxu0 0.0
    %343 = vmatmul.mubr.f32.gmra.mxu0 %v272
    %v344 = vpop.f32.mrf.mxu0
    %v345 = vadd.f32 0.0, %v344
    %v346 = vpop.f32.mrf.mxu0
    %v347 = vadd.f32 0.0, %v346
    %348 = vdwg.mxu0
    %349 = vmatprep.subr.mxu0 0.0
    %350 = vmatpush1.msra.mxu0 %v98
    %351 = vmatprep.subr.mxu0 0.0
    %352 = vmatpush1.msra.mxu0 %v95
    %353 = vmatprep.subr.mxu0 0.0
    %354 = vmatpush1.msra.mxu0 %v92
    %355 = vmatprep.subr.mxu0 0.0
    %356 = vmatpush1.msra.mxu0 %v89
    %357 = vmatprep.subr.mxu0 0.0
    %358 = vmatpush1.msra.mxu0 %v86
    %359 = vmatprep.subr.mxu0 0.0
    %360 = vmatpush1.msra.mxu0 %v83
    %361 = vmatprep.subr.mxu0 0.0
    %362 = vmatpush1.msra.mxu0 %v80
    %363 = vmatprep.subr.mxu0 0.0
    %364 = vmatpush1.msra.mxu0 %v77
    %365 = vmatprep.subr.mxu0 0.0
    %366 = vmatpush1.msra.mxu0 %v74
    %367 = vmatprep.subr.mxu0 0.0
    %368 = vmatpush1.msra.mxu0 %v71
    %369 = vmatprep.subr.mxu0 0.0
    %370 = vmatpush1.msra.mxu0 %v68
    %371 = vmatprep.subr.mxu0 0.0
    %372 = vmatpush1.msra.mxu0 %v65
    %373 = vmatprep.subr.mxu0 0.0
    %374 = vmatpush1.msra.mxu0 %v62
    %375 = vmatprep.subr.mxu0 0.0
    %376 = vmatpush1.msra.mxu0 %v59
    %377 = vmatprep.subr.mxu0 0.0
    %378 = vmatpush1.msra.mxu0 %v56
    %379 = vmatprep.subr.mxu0 0.0
    %380 = vmatpush1.msra.mxu0 %v53
    %381 = vmatprep.subr.mxu0 0.0
    %382 = vmatpush2.msra.mxu0 0.0
    %383 = vmatprep.subr.mxu0 0.0
    %384 = vmatpush2.msra.mxu0 0.0
    %385 = vmatprep.subr.mxu0 0.0
    %386 = vmatpush2.msra.mxu0 0.0
    %387 = vmatprep.subr.mxu0 0.0
    %388 = vmatpush2.msra.mxu0 0.0
    %389 = vmatprep.subr.mxu0 0.0
    %390 = vmatpush2.msra.mxu0 0.0
    %391 = vmatprep.subr.mxu0 0.0
    %392 = vmatpush2.msra.mxu0 0.0
    %393 = vmatprep.subr.mxu0 0.0
    %394 = vmatpush2.msra.mxu0 0.0
    %395 = vmatprep.subr.mxu0 0.0
    %396 = vmatpush2.msra.mxu0 0.0
    %397 = vmatprep.subr.mxu0 0.0
    %398 = vmatpush2.msra.mxu0 0.0
    %399 = vmatprep.subr.mxu0 0.0
    %400 = vmatpush2.msra.mxu0 0.0
    %401 = vmatprep.subr.mxu0 0.0
    %402 = vmatpush2.msra.mxu0 0.0
    %403 = vmatprep.subr.mxu0 0.0
    %404 = vmatpush2.msra.mxu0 0.0
    %405 = vmatprep.subr.mxu0 0.0
    %406 = vmatpush2.msra.mxu0 0.0
    %407 = vmatprep.subr.mxu0 0.0
    %408 = vmatpush2.msra.mxu0 0.0
    %409 = vmatprep.subr.mxu0 0.0
    %410 = vmatpush2.msra.mxu0 0.0
    %411 = vmatprep.subr.mxu0 0.0
    %412 = vmatpush2.msra.mxu0 0.0
    %413 = vmatprep.mubr.f32.mxu0 0.0
    %414 = vmatmul.mubr.f32.gmra.mxu0 %v272
    %v415 = vpop.f32.mrf.mxu0
    %v416 = vadd.f32 0.0, %v415
    %v417 = vpop.f32.mrf.mxu0
    %418 = vdwg.mxu0
    %v419 = vadd.f32 %v275, %v345
    %v420 = vxor.u32 %v419, 2147483648
    %v421 = vmul.f32 %v420, 1.442695
    %v422 = vpow.pop %v421
    %v423 = vadd.f32 %v422, 1.0
    %v424 = vrcp.pop %v423
    %v425 = vmul.f32 1.0, %v424
    %v426 = vadd.f32 %v276, %v347
    %v427 = vxor.u32 %v426, 2147483648
    %v428 = vmul.f32 %v427, 1.442695
    %v429 = vpow.pop %v428
    %v430 = vadd.f32 %v429, 1.0
    %v431 = vrcp.pop %v430
    %v432 = vmul.f32 1.0, %v431
    %v433 = vadd.f32 %v416, %v104
    %v434 = vmul.f32 %v425, %v433
    %v435 = vadd.f32 %v277, %v434
    %v436 = vtanh.pop %v435
    %v437 = vsub.f32 1.0, %v432
    %v438 = vmul.f32 %v437, %v436
    %v439 = vmul.f32 %v432, %v272
    %v440 = vadd.f32 %v438, %v439
    %s441 = scalar_lea.vmem [#allocation8], 8
    %442 = vst [vmem:[%s441] sm:$0xff] %v440
    %s443 = scalar_lea.vmem [#allocation3], 48
    %v444 = vld [vmem:[%s443] sm:$0xff]
    %v445 = vld [vmem:[%s443 + $0x8] sm:$0xff]
    %v446 = vld [vmem:[%s443 + $0x10] sm:$0xff]
    %447 = vmatprep.subr.mxu0 %v97
    %448 = vmatpush1.msra.mxu0 %v96
    %449 = vmatprep.subr.mxu0 %v94
    %450 = vmatpush1.msra.mxu0 %v93
    %451 = vmatprep.subr.mxu0 %v91
    %452 = vmatpush1.msra.mxu0 %v90
    %453 = vmatprep.subr.mxu0 %v88
    %454 = vmatpush1.msra.mxu0 %v87
    %455 = vmatprep.subr.mxu0 %v85
    %456 = vmatpush1.msra.mxu0 %v84
    %457 = vmatprep.subr.mxu0 %v82
    %458 = vmatpush1.msra.mxu0 %v81
    %459 = vmatprep.subr.mxu0 %v79
    %460 = vmatpush1.msra.mxu0 %v78
    %461 = vmatprep.subr.mxu0 %v76
    %462 = vmatpush1.msra.mxu0 %v75
    %463 = vmatprep.subr.mxu0 %v73
    %464 = vmatpush1.msra.mxu0 %v72
    %465 = vmatprep.subr.mxu0 %v70
    %466 = vmatpush1.msra.mxu0 %v69
    %467 = vmatprep.subr.mxu0 %v67
    %468 = vmatpush1.msra.mxu0 %v66
    %469 = vmatprep.subr.mxu0 %v64
    %470 = vmatpush1.msra.mxu0 %v63
    %471 = vmatprep.subr.mxu0 %v61
    %472 = vmatpush1.msra.mxu0 %v60
    %473 = vmatprep.subr.mxu0 %v58
    %474 = vmatpush1.msra.mxu0 %v57
    %475 = vmatprep.subr.mxu0 %v55
    %476 = vmatpush1.msra.mxu0 %v54
    %477 = vmatprep.subr.mxu0 %v52
    %478 = vmatpush1.msra.mxu0 %v51
    %479 = vmatprep.subr.mxu0 0.0
    %480 = vmatpush2.msra.mxu0 0.0
    %481 = vmatprep.subr.mxu0 0.0
    %482 = vmatpush2.msra.mxu0 0.0
    %483 = vmatprep.subr.mxu0 0.0
    %484 = vmatpush2.msra.mxu0 0.0
    %485 = vmatprep.subr.mxu0 0.0
    %486 = vmatpush2.msra.mxu0 0.0
    %487 = vmatprep.subr.mxu0 0.0
    %488 = vmatpush2.msra.mxu0 0.0
    %489 = vmatprep.subr.mxu0 0.0
    %490 = vmatpush2.msra.mxu0 0.0
    %491 = vmatprep.subr.mxu0 0.0
    %492 = vmatpush2.msra.mxu0 0.0
    %493 = vmatprep.subr.mxu0 0.0
    %494 = vmatpush2.msra.mxu0 0.0
    %495 = vmatprep.subr.mxu0 0.0
    %496 = vmatpush2.msra.mxu0 0.0
    %497 = vmatprep.subr.mxu0 0.0
    %498 = vmatpush2.msra.mxu0 0.0
    %499 = vmatprep.subr.mxu0 0.0
    %500 = vmatpush2.msra.mxu0 0.0
    %501 = vmatprep.subr.mxu0 0.0
    %502 = vmatpush2.msra.mxu0 0.0
    %503 = vmatprep.subr.mxu0 0.0
    %504 = vmatpush2.msra.mxu0 0.0
    %505 = vmatprep.subr.mxu0 0.0
    %506 = vmatpush2.msra.mxu0 0.0
    %507 = vmatprep.subr.mxu0 0.0
    %508 = vmatpush2.msra.mxu0 0.0
    %509 = vmatprep.subr.mxu0 0.0
    %510 = vmatpush2.msra.mxu0 0.0
    %511 = vmatprep.mubr.f32.mxu0 0.0
    %512 = vmatmul.mubr.f32.gmra.mxu0 %v440
    %v513 = vpop.f32.mrf.mxu0
    %v514 = vadd.f32 0.0, %v513
    %v515 = vpop.f32.mrf.mxu0
    %v516 = vadd.f32 0.0, %v515
    %517 = vdwg.mxu0
    %518 = vmatprep.subr.mxu0 0.0
    %519 = vmatpush1.msra.mxu0 %v98
    %520 = vmatprep.subr.mxu0 0.0
    %521 = vmatpush1.msra.mxu0 %v95
    %522 = vmatprep.subr.mxu0 0.0
    %523 = vmatpush1.msra.mxu0 %v92
    %524 = vmatprep.subr.mxu0 0.0
    %525 = vmatpush1.msra.mxu0 %v89
    %526 = vmatprep.subr.mxu0 0.0
    %527 = vmatpush1.msra.mxu0 %v86
    %528 = vmatprep.subr.mxu0 0.0
    %529 = vmatpush1.msra.mxu0 %v83
    %530 = vmatprep.subr.mxu0 0.0
    %531 = vmatpush1.msra.mxu0 %v80
    %532 = vmatprep.subr.mxu0 0.0
    %533 = vmatpush1.msra.mxu0 %v77
    %534 = vmatprep.subr.mxu0 0.0
    %535 = vmatpush1.msra.mxu0 %v74
    %536 = vmatprep.subr.mxu0 0.0
    %537 = vmatpush1.msra.mxu0 %v71
    %538 = vmatprep.subr.mxu0 0.0
    %539 = vmatpush1.msra.mxu0 %v68
    %540 = vmatprep.subr.mxu0 0.0
    %541 = vmatpush1.msra.mxu0 %v65
    %542 = vmatprep.subr.mxu0 0.0
    %543 = vmatpush1.msra.mxu0 %v62
    %544 = vmatprep.subr.mxu0 0.0
    %545 = vmatpush1.msra.mxu0 %v59
    %546 = vmatprep.subr.mxu0 0.0
    %547 = vmatpush1.msra.mxu0 %v56
    %548 = vmatprep.subr.mxu0 0.0
    %549 = vmatpush1.msra.mxu0 %v53
    %550 = vmatprep.subr.mxu0 0.0
    %551 = vmatpush2.msra.mxu0 0.0
    %552 = vmatprep.subr.mxu0 0.0
    %553 = vmatpush2.msra.mxu0 0.0
    %554 = vmatprep.subr.mxu0 0.0
    %555 = vmatpush2.msra.mxu0 0.0
    %556 = vmatprep.subr.mxu0 0.0
    %557 = vmatpush2.msra.mxu0 0.0
    %558 = vmatprep.subr.mxu0 0.0
    %559 = vmatpush2.msra.mxu0 0.0
    %560 = vmatprep.subr.mxu0 0.0
    %561 = vmatpush2.msra.mxu0 0.0
    %562 = vmatprep.subr.mxu0 0.0
    %563 = vmatpush2.msra.mxu0 0.0
    %564 = vmatprep.subr.mxu0 0.0
    %565 = vmatpush2.msra.mxu0 0.0
    %566 = vmatprep.subr.mxu0 0.0
    %567 = vmatpush2.msra.mxu0 0.0
    %568 = vmatprep.subr.mxu0 0.0
    %569 = vmatpush2.msra.mxu0 0.0
    %570 = vmatprep.subr.mxu0 0.0
    %571 = vmatpush2.msra.mxu0 0.0
    %572 = vmatprep.subr.mxu0 0.0
    %573 = vmatpush2.msra.mxu0 0.0
    %574 = vmatprep.subr.mxu0 0.0
    %575 = vmatpush2.msra.mxu0 0.0
    %576 = vmatprep.subr.mxu0 0.0
    %577 = vmatpush2.msra.mxu0 0.0
    %578 = vmatprep.subr.mxu0 0.0
    %579 = vmatpush2.msra.mxu0 0.0
    %580 = vmatprep.subr.mxu0 0.0
    %581 = vmatpush2.msra.mxu0 0.0
    %582 = vmatprep.mubr.f32.mxu0 0.0
    %583 = vmatmul.mubr.f32.gmra.mxu0 %v440
    %v584 = vpop.f32.mrf.mxu0
    %v585 = vadd.f32 0.0, %v584
    %v586 = vpop.f32.mrf.mxu0
    %587 = vdwg.mxu0
    %v588 = vadd.f32 %v444, %v514
    %v589 = vxor.u32 %v588, 2147483648
    %v590 = vmul.f32 %v589, 1.442695
    %v591 = vpow.pop %v590
    %v592 = vadd.f32 %v591, 1.0
    %v593 = vrcp.pop %v592
    %v594 = vmul.f32 1.0, %v593
    %v595 = vadd.f32 %v445, %v516
    %v596 = vxor.u32 %v595, 2147483648
    %v597 = vmul.f32 %v596, 1.442695
    %v598 = vpow.pop %v597
    %v599 = vadd.f32 %v598, 1.0
    %v600 = vrcp.pop %v599
    %v601 = vmul.f32 1.0, %v600
    %v602 = vadd.f32 %v585, %v104
    %v603 = vmul.f32 %v594, %v602
    %v604 = vadd.f32 %v446, %v603
    %v605 = vtanh.pop %v604
    %v606 = vsub.f32 1.0, %v601
    %v607 = vmul.f32 %v606, %v605
    %v608 = vmul.f32 %v601, %v440
    %v609 = vadd.f32 %v607, %v608
    %s610 = scalar_lea.vmem [#allocation8], 16
    %611 = vst [vmem:[%s610] sm:$0xff] %v609
    %s612 = scalar_lea.vmem [#allocation3], 72
    %v613 = vld [vmem:[%s612] sm:$0xff]
    %v614 = vld [vmem:[%s612 + $0x8] sm:$0xff]
    %v615 = vld [vmem:[%s612 + $0x10] sm:$0xff]
    %616 = vmatprep.subr.mxu0 %v97
    %617 = vmatpush1.msra.mxu0 %v96
    %618 = vmatprep.subr.mxu0 %v94
    %619 = vmatpush1.msra.mxu0 %v93
    %620 = vmatprep.subr.mxu0 %v91
    %621 = vmatpush1.msra.mxu0 %v90
    %622 = vmatprep.subr.mxu0 %v88
    %623 = vmatpush1.msra.mxu0 %v87
    %624 = vmatprep.subr.mxu0 %v85
    %625 = vmatpush1.msra.mxu0 %v84
    %626 = vmatprep.subr.mxu0 %v82
    %627 = vmatpush1.msra.mxu0 %v81
    %628 = vmatprep.subr.mxu0 %v79
    %629 = vmatpush1.msra.mxu0 %v78
    %630 = vmatprep.subr.mxu0 %v76
    %631 = vmatpush1.msra.mxu0 %v75
    %632 = vmatprep.subr.mxu0 %v73
    %633 = vmatpush1.msra.mxu0 %v72
    %634 = vmatprep.subr.mxu0 %v70
    %635 = vmatpush1.msra.mxu0 %v69
    %636 = vmatprep.subr.mxu0 %v67
    %637 = vmatpush1.msra.mxu0 %v66
    %638 = vmatprep.subr.mxu0 %v64
    %639 = vmatpush1.msra.mxu0 %v63
    %640 = vmatprep.subr.mxu0 %v61
    %641 = vmatpush1.msra.mxu0 %v60
    %642 = vmatprep.subr.mxu0 %v58
    %643 = vmatpush1.msra.mxu0 %v57
    %644 = vmatprep.subr.mxu0 %v55
    %645 = vmatpush1.msra.mxu0 %v54
    %646 = vmatprep.subr.mxu0 %v52
    %647 = vmatpush1.msra.mxu0 %v51
    %648 = vmatprep.subr.mxu0 0.0
    %649 = vmatpush2.msra.mxu0 0.0
    %650 = vmatprep.subr.mxu0 0.0
    %651 = vmatpush2.msra.mxu0 0.0
    %652 = vmatprep.subr.mxu0 0.0
    %653 = vmatpush2.msra.mxu0 0.0
    %654 = vmatprep.subr.mxu0 0.0
    %655 = vmatpush2.msra.mxu0 0.0
    %656 = vmatprep.subr.mxu0 0.0
    %657 = vmatpush2.msra.mxu0 0.0
    %658 = vmatprep.subr.mxu0 0.0
    %659 = vmatpush2.msra.mxu0 0.0
    %660 = vmatprep.subr.mxu0 0.0
    %661 = vmatpush2.msra.mxu0 0.0
    %662 = vmatprep.subr.mxu0 0.0
    %663 = vmatpush2.msra.mxu0 0.0
    %664 = vmatprep.subr.mxu0 0.0
    %665 = vmatpush2.msra.mxu0 0.0
    %666 = vmatprep.subr.mxu0 0.0
    %667 = vmatpush2.msra.mxu0 0.0
    %668 = vmatprep.subr.mxu0 0.0
    %669 = vmatpush2.msra.mxu0 0.0
    %670 = vmatprep.subr.mxu0 0.0
    %671 = vmatpush2.msra.mxu0 0.0
    %672 = vmatprep.subr.mxu0 0.0
    %673 = vmatpush2.msra.mxu0 0.0
    %674 = vmatprep.subr.mxu0 0.0
    %675 = vmatpush2.msra.mxu0 0.0
    %676 = vmatprep.subr.mxu0 0.0
    %677 = vmatpush2.msra.mxu0 0.0
    %678 = vmatprep.subr.mxu0 0.0
    %679 = vmatpush2.msra.mxu0 0.0
    %680 = vmatprep.mubr.f32.mxu0 0.0
    %681 = vmatmul.mubr.f32.gmra.mxu0 %v609
    %v682 = vpop.f32.mrf.mxu0
    %v683 = vadd.f32 0.0, %v682
    %v684 = vpop.f32.mrf.mxu0
    %v685 = vadd.f32 0.0, %v684
    %686 = vdwg.mxu0
    %687 = vmatprep.subr.mxu0 0.0
    %688 = vmatpush1.msra.mxu0 %v98
    %689 = vmatprep.subr.mxu0 0.0
    %690 = vmatpush1.msra.mxu0 %v95
    %691 = vmatprep.subr.mxu0 0.0
    %692 = vmatpush1.msra.mxu0 %v92
    %693 = vmatprep.subr.mxu0 0.0
    %694 = vmatpush1.msra.mxu0 %v89
    %695 = vmatprep.subr.mxu0 0.0
    %696 = vmatpush1.msra.mxu0 %v86
    %697 = vmatprep.subr.mxu0 0.0
    %698 = vmatpush1.msra.mxu0 %v83
    %699 = vmatprep.subr.mxu0 0.0
    %700 = vmatpush1.msra.mxu0 %v80
    %701 = vmatprep.subr.mxu0 0.0
    %702 = vmatpush1.msra.mxu0 %v77
    %703 = vmatprep.subr.mxu0 0.0
    %704 = vmatpush1.msra.mxu0 %v74
    %705 = vmatprep.subr.mxu0 0.0
    %706 = vmatpush1.msra.mxu0 %v71
    %707 = vmatprep.subr.mxu0 0.0
    %708 = vmatpush1.msra.mxu0 %v68
    %709 = vmatprep.subr.mxu0 0.0
    %710 = vmatpush1.msra.mxu0 %v65
    %711 = vmatprep.subr.mxu0 0.0
    %712 = vmatpush1.msra.mxu0 %v62
    %713 = vmatprep.subr.mxu0 0.0
    %714 = vmatpush1.msra.mxu0 %v59
    %715 = vmatprep.subr.mxu0 0.0
    %716 = vmatpush1.msra.mxu0 %v56
    %717 = vmatprep.subr.mxu0 0.0
    %718 = vmatpush1.msra.mxu0 %v53
    %719 = vmatprep.subr.mxu0 0.0
    %720 = vmatpush2.msra.mxu0 0.0
    %721 = vmatprep.subr.mxu0 0.0
    %722 = vmatpush2.msra.mxu0 0.0
    %723 = vmatprep.subr.mxu0 0.0
    %724 = vmatpush2.msra.mxu0 0.0
    %725 = vmatprep.subr.mxu0 0.0
    %726 = vmatpush2.msra.mxu0 0.0
    %727 = vmatprep.subr.mxu0 0.0
    %728 = vmatpush2.msra.mxu0 0.0
    %729 = vmatprep.subr.mxu0 0.0
    %730 = vmatpush2.msra.mxu0 0.0
    %731 = vmatprep.subr.mxu0 0.0
    %732 = vmatpush2.msra.mxu0 0.0
    %733 = vmatprep.subr.mxu0 0.0
    %734 = vmatpush2.msra.mxu0 0.0
    %735 = vmatprep.subr.mxu0 0.0
    %736 = vmatpush2.msra.mxu0 0.0
    %737 = vmatprep.subr.mxu0 0.0
    %738 = vmatpush2.msra.mxu0 0.0
    %739 = vmatprep.subr.mxu0 0.0
    %740 = vmatpush2.msra.mxu0 0.0
    %741 = vmatprep.subr.mxu0 0.0
    %742 = vmatpush2.msra.mxu0 0.0
    %743 = vmatprep.subr.mxu0 0.0
    %744 = vmatpush2.msra.mxu0 0.0
    %745 = vmatprep.subr.mxu0 0.0
    %746 = vmatpush2.msra.mxu0 0.0
    %747 = vmatprep.subr.mxu0 0.0
    %748 = vmatpush2.msra.mxu0 0.0
    %749 = vmatprep.subr.mxu0 0.0
    %750 = vmatpush2.msra.mxu0 0.0
    %751 = vmatprep.mubr.f32.mxu0 0.0
    %752 = vmatmul.mubr.f32.gmra.mxu0 %v609
    %v753 = vpop.f32.mrf.mxu0
    %v754 = vadd.f32 0.0, %v753
    %v755 = vpop.f32.mrf.mxu0
    %756 = vdwg.mxu0
    %v757 = vadd.f32 %v613, %v683
    %v758 = vxor.u32 %v757, 2147483648
    %v759 = vmul.f32 %v758, 1.442695
    %v760 = vpow.pop %v759
    %v761 = vadd.f32 %v760, 1.0
    %v762 = vrcp.pop %v761
    %v763 = vmul.f32 1.0, %v762
    %v764 = vadd.f32 %v614, %v685
    %v765 = vxor.u32 %v764, 2147483648
    %v766 = vmul.f32 %v765, 1.442695
    %v767 = vpow.pop %v766
    %v768 = vadd.f32 %v767, 1.0
    %v769 = vrcp.pop %v768
    %v770 = vmul.f32 1.0, %v769
    %v771 = vadd.f32 %v754, %v104
    %v772 = vmul.f32 %v763, %v771
    %v773 = vadd.f32 %v615, %v772
    %v774 = vtanh.pop %v773
    %v775 = vsub.f32 1.0, %v770
    %v776 = vmul.f32 %v775, %v774
    %v777 = vmul.f32 %v770, %v609
    %v778 = vadd.f32 %v776, %v777
    %s779 = scalar_lea.vmem [#allocation8], 24
    %780 = vst [vmem:[%s779] sm:$0xff] %v778
    %s781 = scalar_lea.vmem [#allocation3], 96
    %v782 = vld [vmem:[%s781] sm:$0xff]
    %v783 = vld [vmem:[%s781 + $0x8] sm:$0xff]
    %v784 = vld [vmem:[%s781 + $0x10] sm:$0xff]
    %785 = vmatprep.subr.mxu0 %v97
    %786 = vmatpush1.msra.mxu0 %v96
    %787 = vmatprep.subr.mxu0 %v94
    %788 = vmatpush1.msra.mxu0 %v93
    %789 = vmatprep.subr.mxu0 %v91
    %790 = vmatpush1.msra.mxu0 %v90
    %791 = vmatprep.subr.mxu0 %v88
    %792 = vmatpush1.msra.mxu0 %v87
    %793 = vmatprep.subr.mxu0 %v85
    %794 = vmatpush1.msra.mxu0 %v84
    %795 = vmatprep.subr.mxu0 %v82
    %796 = vmatpush1.msra.mxu0 %v81
    %797 = vmatprep.subr.mxu0 %v79
    %798 = vmatpush1.msra.mxu0 %v78
    %799 = vmatprep.subr.mxu0 %v76
    %800 = vmatpush1.msra.mxu0 %v75
    %801 = vmatprep.subr.mxu0 %v73
    %802 = vmatpush1.msra.mxu0 %v72
    %803 = vmatprep.subr.mxu0 %v70
    %804 = vmatpush1.msra.mxu0 %v69
    %805 = vmatprep.subr.mxu0 %v67
    %806 = vmatpush1.msra.mxu0 %v66
    %807 = vmatprep.subr.mxu0 %v64
    %808 = vmatpush1.msra.mxu0 %v63
    %809 = vmatprep.subr.mxu0 %v61
    %810 = vmatpush1.msra.mxu0 %v60
    %811 = vmatprep.subr.mxu0 %v58
    %812 = vmatpush1.msra.mxu0 %v57
    %813 = vmatprep.subr.mxu0 %v55
    %814 = vmatpush1.msra.mxu0 %v54
    %815 = vmatprep.subr.mxu0 %v52
    %816 = vmatpush1.msra.mxu0 %v51
    %817 = vmatprep.subr.mxu0 0.0
    %818 = vmatpush2.msra.mxu0 0.0
    %819 = vmatprep.subr.mxu0 0.0
    %820 = vmatpush2.msra.mxu0 0.0
    %821 = vmatprep.subr.mxu0 0.0
    %822 = vmatpush2.msra.mxu0 0.0
    %823 = vmatprep.subr.mxu0 0.0
    %824 = vmatpush2.msra.mxu0 0.0
    %825 = vmatprep.subr.mxu0 0.0
    %826 = vmatpush2.msra.mxu0 0.0
    %827 = vmatprep.subr.mxu0 0.0
    %828 = vmatpush2.msra.mxu0 0.0
    %829 = vmatprep.subr.mxu0 0.0
    %830 = vmatpush2.msra.mxu0 0.0
    %831 = vmatprep.subr.mxu0 0.0
    %832 = vmatpush2.msra.mxu0 0.0
    %833 = vmatprep.subr.mxu0 0.0
    %834 = vmatpush2.msra.mxu0 0.0
    %835 = vmatprep.subr.mxu0 0.0
    %836 = vmatpush2.msra.mxu0 0.0
    %837 = vmatprep.subr.mxu0 0.0
    %838 = vmatpush2.msra.mxu0 0.0
    %839 = vmatprep.subr.mxu0 0.0
    %840 = vmatpush2.msra.mxu0 0.0
    %841 = vmatprep.subr.mxu0 0.0
    %842 = vmatpush2.msra.mxu0 0.0
    %843 = vmatprep.subr.mxu0 0.0
    %844 = vmatpush2.msra.mxu0 0.0
    %845 = vmatprep.subr.mxu0 0.0
    %846 = vmatpush2.msra.mxu0 0.0
    %847 = vmatprep.subr.mxu0 0.0
    %848 = vmatpush2.msra.mxu0 0.0
    %849 = vmatprep.mubr.f32.mxu0 0.0
    %850 = vmatmul.mubr.f32.gmra.mxu0 %v778
    %v851 = vpop.f32.mrf.mxu0
    %v852 = vadd.f32 0.0, %v851
    %v853 = vpop.f32.mrf.mxu0
    %v854 = vadd.f32 0.0, %v853
    %855 = vdwg.mxu0
    %856 = vmatprep.subr.mxu0 0.0
    %857 = vmatpush1.msra.mxu0 %v98
    %858 = vmatprep.subr.mxu0 0.0
    %859 = vmatpush1.msra.mxu0 %v95
    %860 = vmatprep.subr.mxu0 0.0
    %861 = vmatpush1.msra.mxu0 %v92
    %862 = vmatprep.subr.mxu0 0.0
    %863 = vmatpush1.msra.mxu0 %v89
    %864 = vmatprep.subr.mxu0 0.0
    %865 = vmatpush1.msra.mxu0 %v86
    %866 = vmatprep.subr.mxu0 0.0
    %867 = vmatpush1.msra.mxu0 %v83
    %868 = vmatprep.subr.mxu0 0.0
    %869 = vmatpush1.msra.mxu0 %v80
    %870 = vmatprep.subr.mxu0 0.0
    %871 = vmatpush1.msra.mxu0 %v77
    %872 = vmatprep.subr.mxu0 0.0
    %873 = vmatpush1.msra.mxu0 %v74
    %874 = vmatprep.subr.mxu0 0.0
    %875 = vmatpush1.msra.mxu0 %v71
    %876 = vmatprep.subr.mxu0 0.0
    %877 = vmatpush1.msra.mxu0 %v68
    %878 = vmatprep.subr.mxu0 0.0
    %879 = vmatpush1.msra.mxu0 %v65
    %880 = vmatprep.subr.mxu0 0.0
    %881 = vmatpush1.msra.mxu0 %v62
    %882 = vmatprep.subr.mxu0 0.0
    %883 = vmatpush1.msra.mxu0 %v59
    %884 = vmatprep.subr.mxu0 0.0
    %885 = vmatpush1.msra.mxu0 %v56
    %886 = vmatprep.subr.mxu0 0.0
    %887 = vmatpush1.msra.mxu0 %v53
    %888 = vmatprep.subr.mxu0 0.0
    %889 = vmatpush2.msra.mxu0 0.0
    %890 = vmatprep.subr.mxu0 0.0
    %891 = vmatpush2.msra.mxu0 0.0
    %892 = vmatprep.subr.mxu0 0.0
    %893 = vmatpush2.msra.mxu0 0.0
    %894 = vmatprep.subr.mxu0 0.0
    %895 = vmatpush2.msra.mxu0 0.0
    %896 = vmatprep.subr.mxu0 0.0
    %897 = vmatpush2.msra.mxu0 0.0
    %898 = vmatprep.subr.mxu0 0.0
    %899 = vmatpush2.msra.mxu0 0.0
    %900 = vmatprep.subr.mxu0 0.0
    %901 = vmatpush2.msra.mxu0 0.0
    %902 = vmatprep.subr.mxu0 0.0
    %903 = vmatpush2.msra.mxu0 0.0
    %904 = vmatprep.subr.mxu0 0.0
    %905 = vmatpush2.msra.mxu0 0.0
    %906 = vmatprep.subr.mxu0 0.0
    %907 = vmatpush2.msra.mxu0 0.0
    %908 = vmatprep.subr.mxu0 0.0
    %909 = vmatpush2.msra.mxu0 0.0
    %910 = vmatprep.subr.mxu0 0.0
    %911 = vmatpush2.msra.mxu0 0.0
    %912 = vmatprep.subr.mxu0 0.0
    %913 = vmatpush2.msra.mxu0 0.0
    %914 = vmatprep.subr.mxu0 0.0
    %915 = vmatpush2.msra.mxu0 0.0
    %916 = vmatprep.subr.mxu0 0.0
    %917 = vmatpush2.msra.mxu0 0.0
    %918 = vmatprep.subr.mxu0 0.0
    %919 = vmatpush2.msra.mxu0 0.0
    %920 = vmatprep.mubr.f32.mxu0 0.0
    %921 = vmatmul.mubr.f32.gmra.mxu0 %v778
    %v922 = vpop.f32.mrf.mxu0
    %v923 = vadd.f32 0.0, %v922
    %v924 = vpop.f32.mrf.mxu0
    %925 = vdwg.mxu0
    %v926 = vadd.f32 %v782, %v852
    %v927 = vxor.u32 %v926, 2147483648
    %v928 = vmul.f32 %v927, 1.442695
    %v929 = vpow.pop %v928
    %v930 = vadd.f32 %v929, 1.0
    %v931 = vrcp.pop %v930
    %v932 = vmul.f32 1.0, %v931
    %v933 = vadd.f32 %v783, %v854
    %v934 = vxor.u32 %v933, 2147483648
    %v935 = vmul.f32 %v934, 1.442695
    %v936 = vpow.pop %v935
    %v937 = vadd.f32 %v936, 1.0
    %v938 = vrcp.pop %v937
    %v939 = vmul.f32 1.0, %v938
    %v940 = vadd.f32 %v923, %v104
    %v941 = vmul.f32 %v932, %v940
    %v942 = vadd.f32 %v784, %v941
    %v943 = vtanh.pop %v942
    %v944 = vsub.f32 1.0, %v939
    %v945 = vmul.f32 %v944, %v943
    %v946 = vmul.f32 %v939, %v778
    %v947 = vadd.f32 %v945, %v946
    %s948 = scalar_lea.vmem [#allocation8], 32
    %949 = vst [vmem:[%s948] sm:$0xff] %v947
    %s950 = scalar_lea.vmem [#allocation3], 120
    %v951 = vld [vmem:[%s950] sm:$0xff]
    %v952 = vld [vmem:[%s950 + $0x8] sm:$0xff]
    %v953 = vld [vmem:[%s950 + $0x10] sm:$0xff]
    %954 = vmatprep.subr.mxu0 %v97
    %955 = vmatpush1.msra.mxu0 %v96
    %956 = vmatprep.subr.mxu0 %v94
    %957 = vmatpush1.msra.mxu0 %v93
    %958 = vmatprep.subr.mxu0 %v91
    %959 = vmatpush1.msra.mxu0 %v90
    %960 = vmatprep.subr.mxu0 %v88
    %961 = vmatpush1.msra.mxu0 %v87
    %962 = vmatprep.subr.mxu0 %v85
    %963 = vmatpush1.msra.mxu0 %v84
    %964 = vmatprep.subr.mxu0 %v82
    %965 = vmatpush1.msra.mxu0 %v81
    %966 = vmatprep.subr.mxu0 %v79
    %967 = vmatpush1.msra.mxu0 %v78
    %968 = vmatprep.subr.mxu0 %v76
    %969 = vmatpush1.msra.mxu0 %v75
    %970 = vmatprep.subr.mxu0 %v73
    %971 = vmatpush1.msra.mxu0 %v72
    %972 = vmatprep.subr.mxu0 %v70
    %973 = vmatpush1.msra.mxu0 %v69
    %974 = vmatprep.subr.mxu0 %v67
    %975 = vmatpush1.msra.mxu0 %v66
    %976 = vmatprep.subr.mxu0 %v64
    %977 = vmatpush1.msra.mxu0 %v63
    %978 = vmatprep.subr.mxu0 %v61
    %979 = vmatpush1.msra.mxu0 %v60
    %980 = vmatprep.subr.mxu0 %v58
    %981 = vmatpush1.msra.mxu0 %v57
    %982 = vmatprep.subr.mxu0 %v55
    %983 = vmatpush1.msra.mxu0 %v54
    %984 = vmatprep.subr.mxu0 %v52
    %985 = vmatpush1.msra.mxu0 %v51
    %986 = vmatprep.subr.mxu0 0.0
    %987 = vmatpush2.msra.mxu0 0.0
    %988 = vmatprep.subr.mxu0 0.0
    %989 = vmatpush2.msra.mxu0 0.0
    %990 = vmatprep.subr.mxu0 0.0
    %991 = vmatpush2.msra.mxu0 0.0
    %992 = vmatprep.subr.mxu0 0.0
    %993 = vmatpush2.msra.mxu0 0.0
    %994 = vmatprep.subr.mxu0 0.0
    %995 = vmatpush2.msra.mxu0 0.0
    %996 = vmatprep.subr.mxu0 0.0
    %997 = vmatpush2.msra.mxu0 0.0
    %998 = vmatprep.subr.mxu0 0.0
    %999 = vmatpush2.msra.mxu0 0.0
    %1000 = vmatprep.subr.mxu0 0.0
    %1001 = vmatpush2.msra.mxu0 0.0
    %1002 = vmatprep.subr.mxu0 0.0
    %1003 = vmatpush2.msra.mxu0 0.0
    %1004 = vmatprep.subr.mxu0 0.0
    %1005 = vmatpush2.msra.mxu0 0.0
    %1006 = vmatprep.subr.mxu0 0.0
    %1007 = vmatpush2.msra.mxu0 0.0
    %1008 = vmatprep.subr.mxu0 0.0
    %1009 = vmatpush2.msra.mxu0 0.0
    %1010 = vmatprep.subr.mxu0 0.0
    %1011 = vmatpush2.msra.mxu0 0.0
    %1012 = vmatprep.subr.mxu0 0.0
    %1013 = vmatpush2.msra.mxu0 0.0
    %1014 = vmatprep.subr.mxu0 0.0
    %1015 = vmatpush2.msra.mxu0 0.0
    %1016 = vmatprep.subr.mxu0 0.0
    %1017 = vmatpush2.msra.mxu0 0.0
    %1018 = vmatprep.mubr.f32.mxu0 0.0
    %1019 = vmatmul.mubr.f32.gmra.mxu0 %v947
    %v1020 = vpop.f32.mrf.mxu0
    %v1021 = vadd.f32 0.0, %v1020
    %v1022 = vpop.f32.mrf.mxu0
    %v1023 = vadd.f32 0.0, %v1022
    %1024 = vdwg.mxu0
    %1025 = vmatprep.subr.mxu0 0.0
    %1026 = vmatpush1.msra.mxu0 %v98
    %1027 = vmatprep.subr.mxu0 0.0
    %1028 = vmatpush1.msra.mxu0 %v95
    %1029 = vmatprep.subr.mxu0 0.0
    %1030 = vmatpush1.msra.mxu0 %v92
    %1031 = vmatprep.subr.mxu0 0.0
    %1032 = vmatpush1.msra.mxu0 %v89
    %1033 = vmatprep.subr.mxu0 0.0
    %1034 = vmatpush1.msra.mxu0 %v86
    %1035 = vmatprep.subr.mxu0 0.0
    %1036 = vmatpush1.msra.mxu0 %v83
    %1037 = vmatprep.subr.mxu0 0.0
    %1038 = vmatpush1.msra.mxu0 %v80
    %1039 = vmatprep.subr.mxu0 0.0
    %1040 = vmatpush1.msra.mxu0 %v77
    %1041 = vmatprep.subr.mxu0 0.0
    %1042 = vmatpush1.msra.mxu0 %v74
    %1043 = vmatprep.subr.mxu0 0.0
    %1044 = vmatpush1.msra.mxu0 %v71
    %1045 = vmatprep.subr.mxu0 0.0
    %1046 = vmatpush1.msra.mxu0 %v68
    %1047 = vmatprep.subr.mxu0 0.0
    %1048 = vmatpush1.msra.mxu0 %v65
    %1049 = vmatprep.subr.mxu0 0.0
    %1050 = vmatpush1.msra.mxu0 %v62
    %1051 = vmatprep.subr.mxu0 0.0
    %1052 = vmatpush1.msra.mxu0 %v59
    %1053 = vmatprep.subr.mxu0 0.0
    %1054 = vmatpush1.msra.mxu0 %v56
    %1055 = vmatprep.subr.mxu0 0.0
    %1056 = vmatpush1.msra.mxu0 %v53
    %1057 = vmatprep.subr.mxu0 0.0
    %1058 = vmatpush2.msra.mxu0 0.0
    %1059 = vmatprep.subr.mxu0 0.0
    %1060 = vmatpush2.msra.mxu0 0.0
    %1061 = vmatprep.subr.mxu0 0.0
    %1062 = vmatpush2.msra.mxu0 0.0
    %1063 = vmatprep.subr.mxu0 0.0
    %1064 = vmatpush2.msra.mxu0 0.0
    %1065 = vmatprep.subr.mxu0 0.0
    %1066 = vmatpush2.msra.mxu0 0.0
    %1067 = vmatprep.subr.mxu0 0.0
    %1068 = vmatpush2.msra.mxu0 0.0
    %1069 = vmatprep.subr.mxu0 0.0
    %1070 = vmatpush2.msra.mxu0 0.0
    %1071 = vmatprep.subr.mxu0 0.0
    %1072 = vmatpush2.msra.mxu0 0.0
    %1073 = vmatprep.subr.mxu0 0.0
    %1074 = vmatpush2.msra.mxu0 0.0
    %1075 = vmatprep.subr.mxu0 0.0
    %1076 = vmatpush2.msra.mxu0 0.0
    %1077 = vmatprep.subr.mxu0 0.0
    %1078 = vmatpush2.msra.mxu0 0.0
    %1079 = vmatprep.subr.mxu0 0.0
    %1080 = vmatpush2.msra.mxu0 0.0
    %1081 = vmatprep.subr.mxu0 0.0
    %1082 = vmatpush2.msra.mxu0 0.0
    %1083 = vmatprep.subr.mxu0 0.0
    %1084 = vmatpush2.msra.mxu0 0.0
    %1085 = vmatprep.subr.mxu0 0.0
    %1086 = vmatpush2.msra.mxu0 0.0
    %1087 = vmatprep.subr.mxu0 0.0
    %1088 = vmatpush2.msra.mxu0 0.0
    %1089 = vmatprep.mubr.f32.mxu0 0.0
    %1090 = vmatmul.mubr.f32.gmra.mxu0 %v947
    %v1091 = vpop.f32.mrf.mxu0
    %v1092 = vadd.f32 0.0, %v1091
    %v1093 = vpop.f32.mrf.mxu0
    %1094 = vdwg.mxu0
    %v1095 = vadd.f32 %v951, %v1021
    %v1096 = vxor.u32 %v1095, 2147483648
    %v1097 = vmul.f32 %v1096, 1.442695
    %v1098 = vpow.pop %v1097
    %v1099 = vadd.f32 %v1098, 1.0
    %v1100 = vrcp.pop %v1099
    %v1101 = vmul.f32 1.0, %v1100
    %v1102 = vadd.f32 %v952, %v1023
    %v1103 = vxor.u32 %v1102, 2147483648
    %v1104 = vmul.f32 %v1103, 1.442695
    %v1105 = vpow.pop %v1104
    %v1106 = vadd.f32 %v1105, 1.0
    %v1107 = vrcp.pop %v1106
    %v1108 = vmul.f32 1.0, %v1107
    %v1109 = vadd.f32 %v1092, %v104
    %v1110 = vmul.f32 %v1101, %v1109
    %v1111 = vadd.f32 %v953, %v1110
    %v1112 = vtanh.pop %v1111
    %v1113 = vsub.f32 1.0, %v1108
    %v1114 = vmul.f32 %v1113, %v1112
    %v1115 = vmul.f32 %v1108, %v947
    %v1116 = vadd.f32 %v1114, %v1115
    %s1117 = scalar_lea.vmem [#allocation8], 40
    %1118 = vst [vmem:[%s1117] sm:$0xff] %v1116
    %s1119 = scalar_lea.vmem [#allocation3], 144
    %v1120 = vld [vmem:[%s1119] sm:$0xff]
    %v1121 = vld [vmem:[%s1119 + $0x8] sm:$0xff]
    %v1122 = vld [vmem:[%s1119 + $0x10] sm:$0xff]
    %1123 = vmatprep.subr.mxu0 %v97
    %1124 = vmatpush1.msra.mxu0 %v96
    %1125 = vmatprep.subr.mxu0 %v94
    %1126 = vmatpush1.msra.mxu0 %v93
    %1127 = vmatprep.subr.mxu0 %v91
    %1128 = vmatpush1.msra.mxu0 %v90
    %1129 = vmatprep.subr.mxu0 %v88
    %1130 = vmatpush1.msra.mxu0 %v87
    %1131 = vmatprep.subr.mxu0 %v85
    %1132 = vmatpush1.msra.mxu0 %v84
    %1133 = vmatprep.subr.mxu0 %v82
    %1134 = vmatpush1.msra.mxu0 %v81
    %1135 = vmatprep.subr.mxu0 %v79
    %1136 = vmatpush1.msra.mxu0 %v78
    %1137 = vmatprep.subr.mxu0 %v76
    %1138 = vmatpush1.msra.mxu0 %v75
    %1139 = vmatprep.subr.mxu0 %v73
    %1140 = vmatpush1.msra.mxu0 %v72
    %1141 = vmatprep.subr.mxu0 %v70
    %1142 = vmatpush1.msra.mxu0 %v69
    %1143 = vmatprep.subr.mxu0 %v67
    %1144 = vmatpush1.msra.mxu0 %v66
    %1145 = vmatprep.subr.mxu0 %v64
    %1146 = vmatpush1.msra.mxu0 %v63
    %1147 = vmatprep.subr.mxu0 %v61
    %1148 = vmatpush1.msra.mxu0 %v60
    %1149 = vmatprep.subr.mxu0 %v58
    %1150 = vmatpush1.msra.mxu0 %v57
    %1151 = vmatprep.subr.mxu0 %v55
    %1152 = vmatpush1.msra.mxu0 %v54
    %1153 = vmatprep.subr.mxu0 %v52
    %1154 = vmatpush1.msra.mxu0 %v51
    %1155 = vmatprep.subr.mxu0 0.0
    %1156 = vmatpush2.msra.mxu0 0.0
    %1157 = vmatprep.subr.mxu0 0.0
    %1158 = vmatpush2.msra.mxu0 0.0
    %1159 = vmatprep.subr.mxu0 0.0
    %1160 = vmatpush2.msra.mxu0 0.0
    %1161 = vmatprep.subr.mxu0 0.0
    %1162 = vmatpush2.msra.mxu0 0.0
    %1163 = vmatprep.subr.mxu0 0.0
    %1164 = vmatpush2.msra.mxu0 0.0
    %1165 = vmatprep.subr.mxu0 0.0
    %1166 = vmatpush2.msra.mxu0 0.0
    %1167 = vmatprep.subr.mxu0 0.0
    %1168 = vmatpush2.msra.mxu0 0.0
    %1169 = vmatprep.subr.mxu0 0.0
    %1170 = vmatpush2.msra.mxu0 0.0
    %1171 = vmatprep.subr.mxu0 0.0
    %1172 = vmatpush2.msra.mxu0 0.0
    %1173 = vmatprep.subr.mxu0 0.0
    %1174 = vmatpush2.msra.mxu0 0.0
    %1175 = vmatprep.subr.mxu0 0.0
    %1176 = vmatpush2.msra.mxu0 0.0
    %1177 = vmatprep.subr.mxu0 0.0
    %1178 = vmatpush2.msra.mxu0 0.0
    %1179 = vmatprep.subr.mxu0 0.0
    %1180 = vmatpush2.msra.mxu0 0.0
    %1181 = vmatprep.subr.mxu0 0.0
    %1182 = vmatpush2.msra.mxu0 0.0
    %1183 = vmatprep.subr.mxu0 0.0
    %1184 = vmatpush2.msra.mxu0 0.0
    %1185 = vmatprep.subr.mxu0 0.0
    %1186 = vmatpush2.msra.mxu0 0.0
    %1187 = vmatprep.mubr.f32.mxu0 0.0
    %1188 = vmatmul.mubr.f32.gmra.mxu0 %v1116
    %v1189 = vpop.f32.mrf.mxu0
    %v1190 = vadd.f32 0.0, %v1189
    %v1191 = vpop.f32.mrf.mxu0
    %v1192 = vadd.f32 0.0, %v1191
    %1193 = vdwg.mxu0
    %1194 = vmatprep.subr.mxu0 0.0
    %1195 = vmatpush1.msra.mxu0 %v98
    %1196 = vmatprep.subr.mxu0 0.0
    %1197 = vmatpush1.msra.mxu0 %v95
    %1198 = vmatprep.subr.mxu0 0.0
    %1199 = vmatpush1.msra.mxu0 %v92
    %1200 = vmatprep.subr.mxu0 0.0
    %1201 = vmatpush1.msra.mxu0 %v89
    %1202 = vmatprep.subr.mxu0 0.0
    %1203 = vmatpush1.msra.mxu0 %v86
    %1204 = vmatprep.subr.mxu0 0.0
    %1205 = vmatpush1.msra.mxu0 %v83
    %1206 = vmatprep.subr.mxu0 0.0
    %1207 = vmatpush1.msra.mxu0 %v80
    %1208 = vmatprep.subr.mxu0 0.0
    %1209 = vmatpush1.msra.mxu0 %v77
    %1210 = vmatprep.subr.mxu0 0.0
    %1211 = vmatpush1.msra.mxu0 %v74
    %1212 = vmatprep.subr.mxu0 0.0
    %1213 = vmatpush1.msra.mxu0 %v71
    %1214 = vmatprep.subr.mxu0 0.0
    %1215 = vmatpush1.msra.mxu0 %v68
    %1216 = vmatprep.subr.mxu0 0.0
    %1217 = vmatpush1.msra.mxu0 %v65
    %1218 = vmatprep.subr.mxu0 0.0
    %1219 = vmatpush1.msra.mxu0 %v62
    %1220 = vmatprep.subr.mxu0 0.0
    %1221 = vmatpush1.msra.mxu0 %v59
    %1222 = vmatprep.subr.mxu0 0.0
    %1223 = vmatpush1.msra.mxu0 %v56
    %1224 = vmatprep.subr.mxu0 0.0
    %1225 = vmatpush1.msra.mxu0 %v53
    %1226 = vmatprep.subr.mxu0 0.0
    %1227 = vmatpush2.msra.mxu0 0.0
    %1228 = vmatprep.subr.mxu0 0.0
    %1229 = vmatpush2.msra.mxu0 0.0
    %1230 = vmatprep.subr.mxu0 0.0
    %1231 = vmatpush2.msra.mxu0 0.0
    %1232 = vmatprep.subr.mxu0 0.0
    %1233 = vmatpush2.msra.mxu0 0.0
    %1234 = vmatprep.subr.mxu0 0.0
    %1235 = vmatpush2.msra.mxu0 0.0
    %1236 = vmatprep.subr.mxu0 0.0
    %1237 = vmatpush2.msra.mxu0 0.0
    %1238 = vmatprep.subr.mxu0 0.0
    %1239 = vmatpush2.msra.mxu0 0.0
    %1240 = vmatprep.subr.mxu0 0.0
    %1241 = vmatpush2.msra.mxu0 0.0
    %1242 = vmatprep.subr.mxu0 0.0
    %1243 = vmatpush2.msra.mxu0 0.0
    %1244 = vmatprep.subr.mxu0 0.0
    %1245 = vmatpush2.msra.mxu0 0.0
    %1246 = vmatprep.subr.mxu0 0.0
    %1247 = vmatpush2.msra.mxu0 0.0
    %1248 = vmatprep.subr.mxu0 0.0
    %1249 = vmatpush2.msra.mxu0 0.0
    %1250 = vmatprep.subr.mxu0 0.0
    %1251 = vmatpush2.msra.mxu0 0.0
    %1252 = vmatprep.subr.mxu0 0.0
    %1253 = vmatpush2.msra.mxu0 0.0
    %1254 = vmatprep.subr.mxu0 0.0
    %1255 = vmatpush2.msra.mxu0 0.0
    %1256 = vmatprep.subr.mxu0 0.0
    %1257 = vmatpush2.msra.mxu0 0.0
    %1258 = vmatprep.mubr.f32.mxu0 0.0
    %1259 = vmatmul.mubr.f32.gmra.mxu0 %v1116
    %v1260 = vpop.f32.mrf.mxu0
    %v1261 = vadd.f32 0.0, %v1260
    %v1262 = vpop.f32.mrf.mxu0
    %1263 = vdwg.mxu0
    %v1264 = vadd.f32 %v1120, %v1190
    %v1265 = vxor.u32 %v1264, 2147483648
    %v1266 = vmul.f32 %v1265, 1.442695
    %v1267 = vpow.pop %v1266
    %v1268 = vadd.f32 %v1267, 1.0
    %v1269 = vrcp.pop %v1268
    %v1270 = vmul.f32 1.0, %v1269
    %v1271 = vadd.f32 %v1121, %v1192
    %v1272 = vxor.u32 %v1271, 2147483648
    %v1273 = vmul.f32 %v1272, 1.442695
    %v1274 = vpow.pop %v1273
    %v1275 = vadd.f32 %v1274, 1.0
    %v1276 = vrcp.pop %v1275
    %v1277 = vmul.f32 1.0, %v1276
    %v1278 = vadd.f32 %v1261, %v104
    %v1279 = vmul.f32 %v1270, %v1278
    %v1280 = vadd.f32 %v1122, %v1279
    %v1281 = vtanh.pop %v1280
    %v1282 = vsub.f32 1.0, %v1277
    %v1283 = vmul.f32 %v1282, %v1281
    %v1284 = vmul.f32 %v1277, %v1116
    %v1285 = vadd.f32 %v1283, %v1284
    %s1286 = scalar_lea.vmem [#allocation8], 48
    %1287 = vst [vmem:[%s1286] sm:$0xff] %v1285
    %s1288 = scalar_lea.vmem [#allocation3], 168
    %v1289 = vld [vmem:[%s1288] sm:$0xff]
    %v1290 = vld [vmem:[%s1288 + $0x8] sm:$0xff]
    %v1291 = vld [vmem:[%s1288 + $0x10] sm:$0xff]
    %1292 = vmatprep.subr.mxu0 %v97
    %1293 = vmatpush1.msra.mxu0 %v96
    %1294 = vmatprep.subr.mxu0 %v94
    %1295 = vmatpush1.msra.mxu0 %v93
    %1296 = vmatprep.subr.mxu0 %v91
    %1297 = vmatpush1.msra.mxu0 %v90
    %1298 = vmatprep.subr.mxu0 %v88
    %1299 = vmatpush1.msra.mxu0 %v87
    %1300 = vmatprep.subr.mxu0 %v85
    %1301 = vmatpush1.msra.mxu0 %v84
    %1302 = vmatprep.subr.mxu0 %v82
    %1303 = vmatpush1.msra.mxu0 %v81
    %1304 = vmatprep.subr.mxu0 %v79
    %1305 = vmatpush1.msra.mxu0 %v78
    %1306 = vmatprep.subr.mxu0 %v76
    %1307 = vmatpush1.msra.mxu0 %v75
    %1308 = vmatprep.subr.mxu0 %v73
    %1309 = vmatpush1.msra.mxu0 %v72
    %1310 = vmatprep.subr.mxu0 %v70
    %1311 = vmatpush1.msra.mxu0 %v69
    %1312 = vmatprep.subr.mxu0 %v67
    %1313 = vmatpush1.msra.mxu0 %v66
    %1314 = vmatprep.subr.mxu0 %v64
    %1315 = vmatpush1.msra.mxu0 %v63
    %1316 = vmatprep.subr.mxu0 %v61
    %1317 = vmatpush1.msra.mxu0 %v60
    %1318 = vmatprep.subr.mxu0 %v58
    %1319 = vmatpush1.msra.mxu0 %v57
    %1320 = vmatprep.subr.mxu0 %v55
    %1321 = vmatpush1.msra.mxu0 %v54
    %1322 = vmatprep.subr.mxu0 %v52
    %1323 = vmatpush1.msra.mxu0 %v51
    %1324 = vmatprep.subr.mxu0 0.0
    %1325 = vmatpush2.msra.mxu0 0.0
    %1326 = vmatprep.subr.mxu0 0.0
    %1327 = vmatpush2.msra.mxu0 0.0
    %1328 = vmatprep.subr.mxu0 0.0
    %1329 = vmatpush2.msra.mxu0 0.0
    %1330 = vmatprep.subr.mxu0 0.0
    %1331 = vmatpush2.msra.mxu0 0.0
    %1332 = vmatprep.subr.mxu0 0.0
    %1333 = vmatpush2.msra.mxu0 0.0
    %1334 = vmatprep.subr.mxu0 0.0
    %1335 = vmatpush2.msra.mxu0 0.0
    %1336 = vmatprep.subr.mxu0 0.0
    %1337 = vmatpush2.msra.mxu0 0.0
    %1338 = vmatprep.subr.mxu0 0.0
    %1339 = vmatpush2.msra.mxu0 0.0
    %1340 = vmatprep.subr.mxu0 0.0
    %1341 = vmatpush2.msra.mxu0 0.0
    %1342 = vmatprep.subr.mxu0 0.0
    %1343 = vmatpush2.msra.mxu0 0.0
    %1344 = vmatprep.subr.mxu0 0.0
    %1345 = vmatpush2.msra.mxu0 0.0
    %1346 = vmatprep.subr.mxu0 0.0
    %1347 = vmatpush2.msra.mxu0 0.0
    %1348 = vmatprep.subr.mxu0 0.0
    %1349 = vmatpush2.msra.mxu0 0.0
    %1350 = vmatprep.subr.mxu0 0.0
    %1351 = vmatpush2.msra.mxu0 0.0
    %1352 = vmatprep.subr.mxu0 0.0
    %1353 = vmatpush2.msra.mxu0 0.0
    %1354 = vmatprep.subr.mxu0 0.0
    %1355 = vmatpush2.msra.mxu0 0.0
    %1356 = vmatprep.mubr.f32.mxu0 0.0
    %1357 = vmatmul.mubr.f32.gmra.mxu0 %v1285
    %v1358 = vpop.f32.mrf.mxu0
    %v1359 = vadd.f32 0.0, %v1358
    %v1360 = vpop.f32.mrf.mxu0
    %v1361 = vadd.f32 0.0, %v1360
    %1362 = vdwg.mxu0
    %1363 = vmatprep.subr.mxu0 0.0
    %1364 = vmatpush1.msra.mxu0 %v98
    %1365 = vmatprep.subr.mxu0 0.0
    %1366 = vmatpush1.msra.mxu0 %v95
    %1367 = vmatprep.subr.mxu0 0.0
    %1368 = vmatpush1.msra.mxu0 %v92
    %1369 = vmatprep.subr.mxu0 0.0
    %1370 = vmatpush1.msra.mxu0 %v89
    %1371 = vmatprep.subr.mxu0 0.0
    %1372 = vmatpush1.msra.mxu0 %v86
    %1373 = vmatprep.subr.mxu0 0.0
    %1374 = vmatpush1.msra.mxu0 %v83
    %1375 = vmatprep.subr.mxu0 0.0
    %1376 = vmatpush1.msra.mxu0 %v80
    %1377 = vmatprep.subr.mxu0 0.0
    %1378 = vmatpush1.msra.mxu0 %v77
    %1379 = vmatprep.subr.mxu0 0.0
    %1380 = vmatpush1.msra.mxu0 %v74
    %1381 = vmatprep.subr.mxu0 0.0
    %1382 = vmatpush1.msra.mxu0 %v71
    %1383 = vmatprep.subr.mxu0 0.0
    %1384 = vmatpush1.msra.mxu0 %v68
    %1385 = vmatprep.subr.mxu0 0.0
    %1386 = vmatpush1.msra.mxu0 %v65
    %1387 = vmatprep.subr.mxu0 0.0
    %1388 = vmatpush1.msra.mxu0 %v62
    %1389 = vmatprep.subr.mxu0 0.0
    %1390 = vmatpush1.msra.mxu0 %v59
    %1391 = vmatprep.subr.mxu0 0.0
    %1392 = vmatpush1.msra.mxu0 %v56
    %1393 = vmatprep.subr.mxu0 0.0
    %1394 = vmatpush1.msra.mxu0 %v53
    %1395 = vmatprep.subr.mxu0 0.0
    %1396 = vmatpush2.msra.mxu0 0.0
    %1397 = vmatprep.subr.mxu0 0.0
    %1398 = vmatpush2.msra.mxu0 0.0
    %1399 = vmatprep.subr.mxu0 0.0
    %1400 = vmatpush2.msra.mxu0 0.0
    %1401 = vmatprep.subr.mxu0 0.0
    %1402 = vmatpush2.msra.mxu0 0.0
    %1403 = vmatprep.subr.mxu0 0.0
    %1404 = vmatpush2.msra.mxu0 0.0
    %1405 = vmatprep.subr.mxu0 0.0
    %1406 = vmatpush2.msra.mxu0 0.0
    %1407 = vmatprep.subr.mxu0 0.0
    %1408 = vmatpush2.msra.mxu0 0.0
    %1409 = vmatprep.subr.mxu0 0.0
    %1410 = vmatpush2.msra.mxu0 0.0
    %1411 = vmatprep.subr.mxu0 0.0
    %1412 = vmatpush2.msra.mxu0 0.0
    %1413 = vmatprep.subr.mxu0 0.0
    %1414 = vmatpush2.msra.mxu0 0.0
    %1415 = vmatprep.subr.mxu0 0.0
    %1416 = vmatpush2.msra.mxu0 0.0
    %1417 = vmatprep.subr.mxu0 0.0
    %1418 = vmatpush2.msra.mxu0 0.0
    %1419 = vmatprep.subr.mxu0 0.0
    %1420 = vmatpush2.msra.mxu0 0.0
    %1421 = vmatprep.subr.mxu0 0.0
    %1422 = vmatpush2.msra.mxu0 0.0
    %1423 = vmatprep.subr.mxu0 0.0
    %1424 = vmatpush2.msra.mxu0 0.0
    %1425 = vmatprep.subr.mxu0 0.0
    %1426 = vmatpush2.msra.mxu0 0.0
    %1427 = vmatprep.mubr.f32.mxu0 0.0
    %1428 = vmatmul.mubr.f32.gmra.mxu0 %v1285
    %v1429 = vpop.f32.mrf.mxu0
    %v1430 = vadd.f32 0.0, %v1429
    %v1431 = vpop.f32.mrf.mxu0
    %1432 = vdwg.mxu0
    %v1433 = vadd.f32 %v1289, %v1359
    %v1434 = vxor.u32 %v1433, 2147483648
    %v1435 = vmul.f32 %v1434, 1.442695
    %v1436 = vpow.pop %v1435
    %v1437 = vadd.f32 %v1436, 1.0
    %v1438 = vrcp.pop %v1437
    %v1439 = vmul.f32 1.0, %v1438
    %v1440 = vadd.f32 %v1290, %v1361
    %v1441 = vxor.u32 %v1440, 2147483648
    %v1442 = vmul.f32 %v1441, 1.442695
    %v1443 = vpow.pop %v1442
    %v1444 = vadd.f32 %v1443, 1.0
    %v1445 = vrcp.pop %v1444
    %v1446 = vmul.f32 1.0, %v1445
    %v1447 = vadd.f32 %v1430, %v104
    %v1448 = vmul.f32 %v1439, %v1447
    %v1449 = vadd.f32 %v1291, %v1448
    %v1450 = vtanh.pop %v1449
    %v1451 = vsub.f32 1.0, %v1446
    %v1452 = vmul.f32 %v1451, %v1450
    %v1453 = vmul.f32 %v1446, %v1285
    %v1454 = vadd.f32 %v1452, %v1453
    %s1455 = scalar_lea.vmem [#allocation8], 56
    %1456 = vst [vmem:[%s1455] sm:$0xff] %v1454
    %p1457 = scmp.lt.s32.totalorder 0, 0
    // Predicated region
    $region26: #{tpu_custom_call.1} parent=1 // pred_check
      %p1458 = pneg %p1457
    $region27: #{tpu_custom_call.1} parent=1 // pred_check_branch
      %1460 = sbr.rel (%p1458) target = $region29
    $region28: #{tpu_custom_call.1} parent=1 // pred_region
      %1461 = vst [vmem:[#allocation2] sm:$0xff] %v1454
    $region29: #{tpu_custom_call.1} parent=1 // pred_fallthru
      _
    // Predicated region
    $region30: #{tpu_custom_call.1} parent=1 // pred_check
      %p1462 = pneg %p46
    $region31: #{tpu_custom_call.1} parent=1 // pred_check_branch
      %1464 = sbr.rel (%p1462) target = $region33
    $region32: #{tpu_custom_call.1} parent=1 // pred_region
      %1465 = vst [vmem:[#allocation9] sm:$0xff] %v1454
    $region33: #{tpu_custom_call.1} parent=1 // pred_fallthru
      _
    // Predicated region
    $region34: #{tpu_custom_call.1} parent=1 // pred_check
      _
    $region35: #{tpu_custom_call.1} parent=1 // pred_check_branch
      %1467 = sbr.rel (0) target = $region37
    $region36: #{tpu_custom_call.1} parent=1 // pred_region
      %s1469 = ssub.s32 1024, 1024
      %1470 = vsyncadd [#allocation5], %s1469
      %s1471 = sshll.u32 [#allocation8], 4
      %s1472 = int_to_ptr.vmem [resolvable:$true] %s1471
      %1477 = dma.vmem_to_hbm [thread:$0]  %s1472, 1024, %s3, [#allocation5], 128, 128, 8
    $region37: #{tpu_custom_call.1} parent=1 // pred_fallthru
      _
    // Predicated region
    $region38: #{tpu_custom_call.1} parent=1 // pred_check
      _
    $region39: #{tpu_custom_call.1} parent=1 // pred_check_branch
      %1479 = sbr.rel (0) target = $region41
    $region40: #{tpu_custom_call.1} parent=1 // pred_region
      %s1481 = ssub.s32 128, 128
      %1482 = vsyncadd [#allocation10], %s1481
      %s1484 = sshll.u32 [#allocation9], 4
      %s1485 = int_to_ptr.vmem [resolvable:$true] %s1484
      %1487 = dma.vmem_to_hbm [thread:$0]  %s1485, 128, %s4, [#allocation10]
    $region41: #{tpu_custom_call.1} parent=1 // pred_fallthru
      _
    // Predicated region
    $region42: #{tpu_custom_call.1} parent=1 // pred_check
      _
    $region43: #{tpu_custom_call.1} parent=1 // pred_check_branch
      %1489 = sbr.rel (0) target = $region45
    $region44: #{tpu_custom_call.1} parent=1 // pred_region
      %1490 = dma.done [#allocation5], 1024
    $region45: #{tpu_custom_call.1} parent=1 // pred_fallthru
      _
    // Predicated region
    $region46: #{tpu_custom_call.1} parent=1 // pred_check
      _
    $region47: #{tpu_custom_call.1} parent=1 // pred_check_branch
      %1492 = sbr.rel (0) target = $region49
    $region48: #{tpu_custom_call.1} parent=1 // pred_region
      %1493 = dma.done [#allocation10], 128
    $region49: #{tpu_custom_call.1} parent=1 // pred_fallthru
      _
    %1494 = vsyncpa [#allocation4], 1
    %1495 = vsyncpa [#allocation7], 1
    %1496 = vsyncpa [#allocation5], 1
    %1497 = vsyncpa [#allocation10], 1

</llo_original>
